<compile_context>
chip_gen: v7x
topology: tpu7x:2x2x1
jax: 0.10.0
libtpu: 0.0.40
codegen_flags: <defaults>
</compile_context>

<pallas_src>
import numpy as np
import jax
import jax.numpy as jnp
from jax.experimental import pallas as pl
from jax.experimental.pallas import tpu as pltpu


# ----------------------------------------------------------------------------
# Deterministic graph construction (setup-only, NumPy).
# TODO(synk): the original `Graph` class is not provided; a deterministic
# synthetic 25-node skeleton-like edge list is used instead (same shapes).
# ----------------------------------------------------------------------------
def get_adjacency_matrix(edges, num_nodes):
    A = np.zeros((num_nodes, num_nodes), dtype=np.float32)
    for i, j in edges:
        A[i, j] = 1.0
        A[j, i] = 1.0
    return A


def k_adjacency(A, k, with_self=False, self_factor=1.0):
    I = np.eye(len(A), dtype=A.dtype)
    if k == 0:
        return I
    Ak = (np.minimum(np.linalg.matrix_power(A + I, k), 1)
          - np.minimum(np.linalg.matrix_power(A + I, k - 1), 1))
    if with_self:
        Ak = Ak + self_factor * I
    return Ak.astype(np.float32)


def normalize_adjacency_matrix(A):
    deg = A.sum(-1)
    deg_inv_sqrt = np.power(deg, -0.5, where=deg > 0, out=np.zeros_like(deg))
    Dinv = np.eye(len(A), dtype=A.dtype) * deg_inv_sqrt
    return (Dinv @ A @ Dinv).astype(np.float32)


def build_A_powers(num_scales, num_nodes):
    # Simple deterministic skeleton: chain 0-1-...-(V-1) plus a few branches.
    edges = [(i, i + 1) for i in range(num_nodes - 1)]
    edges += [(0, 5), (0, 10), (5, 15), (10, 20)]
    edges = [(i, j) for (i, j) in edges if i < num_nodes and j < num_nodes]
    A_binary = get_adjacency_matrix(edges, num_nodes)
    A_powers = [k_adjacency(A_binary, k, with_self=True) for k in range(num_scales)]
    A_powers = np.concatenate([normalize_adjacency_matrix(g) for g in A_powers])
    return A_powers.astype(np.float32)  # (num_scales*V, V)


# ----------------------------------------------------------------------------
# Pallas kernels
# ----------------------------------------------------------------------------
def _msgconv_fused_kernel(x_ref, bdt_ref, w_ref, b_ref, y_ref, s1_ref, s2_ref):
    # x_ref:   (1, C, T*V)   one sample, channels x (time*joint), lane-dense
    # bdt_ref: (S, K, K)     block-diag graph operators  I_{TMI} (x) A_s^T, K = TMI*V
    # w_ref:   (S, O, C)     conv1x1 weight regrouped per scale
    # b_ref:   (O, 1)        conv1x1 bias
    # y_ref:   (1, O, T*V)   pre-BN output (lane-dense stores)
    # s1_ref, s2_ref: (1, O, 1)  per-sample channel sum / sum-of-squares (for BN stats)
    S, K, _ = bdt_ref.shape
    O = w_ref.shape[1]
    TV = x_ref.shape[2]
    num_sub = TV // K                        # inner time tiles (static)

    bdts = [bdt_ref[s] for s in range(S)]    # hoisted, resident in VMEM
    ws = [w_ref[s] for s in range(S)]
    bias = b_ref[...]                        # (O, 1)

    s1 = jnp.zeros((O, 1), jnp.float32)
    s2 = jnp.zeros((O, 1), jnp.float32)
    for j in range(num_sub):                 # static unrolled inner loop
        lo, hi = j * K, (j + 1) * K
        xs = x_ref[0, :, lo:hi]              # (C, K)
        acc = jnp.zeros((O, K), jnp.float32)
        for s in range(S):
            # graph aggregation for TMI frames at once (one MXU matmul, K-dim = TMI*V)
            supp = jnp.dot(xs, bdts[s], preferred_element_type=jnp.float32)      # (C, K)
            # per-scale 1x1 conv (channel mix), accumulated in f32
            acc = acc + jnp.dot(ws[s], supp, preferred_element_type=jnp.float32)  # (O, K)
        acc = acc + bias
        y_ref[0, :, lo:hi] = acc
        # BN partial statistics (XLU lane reductions; unit has slack)
        s1 = s1 + jnp.sum(acc, axis=1, keepdims=True)
        s2 = s2 + jnp.sum(acc * acc, axis=1, keepdims=True)
    s1_ref[0] = s1
    s2_ref[0] = s2


def _bn_relu_kernel(y_ref, scale_ref, shift_ref, o_ref):
    # y_ref/o_ref: (1, O, T*V); scale/shift: (O, 1) broadcast over lanes.
    o_ref[0] = jnp.maximum(y_ref[0] * scale_ref[...] + shift_ref[...], 0.0)


# ----------------------------------------------------------------------------
# Full forward
# ----------------------------------------------------------------------------
def multiscale_graphconv_forward(x, A_eff, w_conv, b_conv, gamma, beta,
                                 num_scales, inner_t=None):
    # x: (N, C, V, T)  -- PyTorch module input (forward starts with x.transpose(2, 3))
    N, C, V, T = x.shape
    S = num_scales
    O = w_conv.shape[0]
    TV = T * V

    # module's transpose(2,3); lay each sample out as (C, T*V), joints minor.
    xt = jnp.transpose(x, (0, 1, 3, 2)).reshape(N, C, TV).astype(jnp.float32)

    # Inner time tile: largest divisor of T up to 10 -> MXU K-dim = inner_t*V (~250).
    if inner_t is None:
        inner_t = 1
        for d in range(min(T, 10), 0, -1):
            if T % d == 0:
                inner_t = d
                break
    assert T % inner_t == 0
    K = inner_t * V

    # Block-diagonal (transposed) graph operators: BDT[s] = I_{inner_t} (x) A_s^T.
    A3 = A_eff.reshape(S, V, V).astype(jnp.float32)
    eye = jnp.eye(inner_t, dtype=jnp.float32)
    BDT = jnp.einsum('tp,svu->stupv', eye, A3).reshape(S, K, K)

    # Conv2d(S*C -> O, 1x1) weight regrouped per scale: Wr[s, o, c] = w_conv[o, s*C + c].
    Wr = w_conv.reshape(O, S, C).transpose(1, 0, 2).astype(jnp.float32)
    b2 = b_conv.reshape(O, 1).astype(jnp.float32)

    num_sub = TV // K
    flops = int(N) * num_sub * S * (2 * C * K * K + 2 * O * C * K)
    bytes_accessed = 4 * (N * C * TV + N * O * TV + S * K * K + S * O * C
                          + O + 2 * N * O)

    y_pre, ssum, ssq = pl.pallas_call(
        _msgconv_fused_kernel,
        out_shape=(jax.ShapeDtypeStruct((N, O, TV), jnp.float32),
                   jax.ShapeDtypeStruct((N, O, 1), jnp.float32),
                   jax.ShapeDtypeStruct((N, O, 1), jnp.float32)),
        grid=(N,),
        in_specs=[pl.BlockSpec((1, C, TV), lambda n: (n, 0, 0)),
                  pl.BlockSpec((S, K, K), lambda n: (0, 0, 0)),   # resident
                  pl.BlockSpec((S, O, C), lambda n: (0, 0, 0)),   # resident
                  pl.BlockSpec((O, 1), lambda n: (0, 0))],        # resident
        out_specs=(pl.BlockSpec((1, O, TV), lambda n: (n, 0, 0)),
                   pl.BlockSpec((1, O, 1), lambda n: (n, 0, 0)),
                   pl.BlockSpec((1, O, 1), lambda n: (n, 0, 0))),
        compiler_params=pltpu.CompilerParams(
            dimension_semantics=("parallel",),
            vmem_limit_bytes=32 * 1024 * 1024),
        cost_estimate=pl.CostEstimate(flops=flops, transcendentals=0,
                                      bytes_accessed=bytes_accessed),
    )(xt, BDT, Wr, b2)

    # BatchNorm2d (training-mode) statistics over (N, T, V): tiny O-sized reduction.
    cnt = float(N * TV)
    mu = jnp.sum(ssum[:, :, 0], axis=0) / cnt                 # (O,)
    ex2 = jnp.sum(ssq[:, :, 0], axis=0) / cnt
    var = jnp.maximum(ex2 - mu * mu, 0.0)
    inv = jax.lax.rsqrt(var + 1e-5)
    scale = (gamma * inv).reshape(O, 1).astype(jnp.float32)
    shift = (beta - mu * gamma * inv).reshape(O, 1).astype(jnp.float32)

    out = pl.pallas_call(
        _bn_relu_kernel,
        out_shape=jax.ShapeDtypeStruct((N, O, TV), jnp.float32),
        grid=(N,),
        in_specs=[pl.BlockSpec((1, O, TV), lambda n: (n, 0, 0)),
                  pl.BlockSpec((O, 1), lambda n: (0, 0)),
                  pl.BlockSpec((O, 1), lambda n: (0, 0))],
        out_specs=pl.BlockSpec((1, O, TV), lambda n: (n, 0, 0)),
        compiler_params=pltpu.CompilerParams(
            dimension_semantics=("parallel",)),
    )(y_pre, scale, shift)

    # (N, O, T*V) -> (N, O, T, V): free reshape, matches the PyTorch module output.
    return out.reshape(N, O, T, V)


# Pure-JAX reference (same math) for correctness checking.
def reference_forward(x, A_eff, w_conv, b_conv, gamma, beta, num_scales):
    N, C, V, T = x.shape
    xt = jnp.transpose(x, (0, 1, 3, 2))                        # (N, C, T, V)
    support = jnp.einsum('vu,nctu->nctv', A_eff, xt)           # (N, C, T, S*V)
    support = support.reshape(N, C, T, num_scales, V)
    support = jnp.transpose(support, (0, 3, 1, 2, 4)).reshape(
        N, num_scales * C, T, V)
    y = jnp.einsum('ok,nktv->notv', w_conv, support) + b_conv.reshape(1, -1, 1, 1)
    mu = jnp.mean(y, axis=(0, 2, 3), keepdims=True)
    var = jnp.mean((y - mu) ** 2, axis=(0, 2, 3), keepdims=True)
    yhat = (y - mu) * jax.lax.rsqrt(var + 1e-5)
    y = gamma.reshape(1, -1, 1, 1) * yhat + beta.reshape(1, -1, 1, 1)
    return jnp.maximum(y, 0.0)


if __name__ == "__main__":
    # Small, module-consistent shapes.
    num_scales = 3
    N, C_in, V, T = 2, 4, 25, 8
    C_out = 32

    key = jax.random.PRNGKey(0)
    k_x, k_res, k_w, k_b = jax.random.split(key, 4)

    # Input (N, C, V, T) — transposed internally, matching the PyTorch forward.
    x = jax.random.normal(k_x, (N, C_in, V, T), dtype=jnp.float32)

    # Graph adjacency powers (num_scales*V, V) + learnable residual mask.
    A_powers = jnp.asarray(build_A_powers(num_scales, V))
    A_res = jax.random.uniform(k_res, A_powers.shape, jnp.float32,
                               minval=-1e-6, maxval=1e-6)
    A_eff = A_powers + A_res

    # Conv2d(S*C_in, C_out, 1) weight (O, S*C_in) and bias (O,).
    w_conv = jax.random.normal(k_w, (C_out, num_scales * C_in), jnp.float32) * 0.1
    b_conv = jax.random.normal(k_b, (C_out,), jnp.float32) * 0.1
    # BatchNorm2d affine params at their PyTorch defaults.
    gamma = jnp.ones((C_out,), jnp.float32)
    beta = jnp.zeros((C_out,), jnp.float32)

    fwd = jax.jit(lambda x_, a_, w_, b_, g_, bt_: multiscale_graphconv_forward(
        x_, a_, w_, b_, g_, bt_, num_scales))
    out = jax.block_until_ready(fwd(x, A_eff, w_conv, b_conv, gamma, beta))

    ref = jax.block_until_ready(
        reference_forward(x, A_eff, w_conv, b_conv, gamma, beta, num_scales))

    assert out.shape == (N, C_out, T, V), out.shape
    np.testing.assert_allclose(np.asarray(out), np.asarray(ref),
                               rtol=1e-4, atol=1e-4)
    print("KERNEL_OK")
</pallas_src>

<mosaic_0001>
module attributes {stable_mosaic.version = 11 : i64} {
  func.func @_msgconv_fused_kernel(%arg0: i32, %arg1: memref<1x4x200xf32, #tpu.memory_space<vmem>>, %arg2: memref<3x200x200xf32, #tpu.memory_space<vmem>>, %arg3: memref<3x32x4xf32, #tpu.memory_space<vmem>>, %arg4: memref<32x1xf32, #tpu.memory_space<vmem>>, %arg5: memref<1x32x200xf32, #tpu.memory_space<vmem>>, %arg6: memref<1x32x1xf32, #tpu.memory_space<vmem>>, %arg7: memref<1x32x1xf32, #tpu.memory_space<vmem>>) attributes {dimension_semantics = [#tpu.dimension_semantics<parallel>], iteration_bounds = array<i64: 2>, scalar_prefetch = 0 : i64, scratch_operands = 0 : i64, tpu.core_type = #tpu.core_type<tc>, window_params = [{transform_indices = @transform_0, window_bounds = array<i64: 1, 4, 200>}, {pipeline_mode = #tpu.pipeline_mode<synchronous>, transform_indices = @transform_1, window_bounds = array<i64: 3, 200, 200>}, {pipeline_mode = #tpu.pipeline_mode<synchronous>, transform_indices = @transform_2, window_bounds = array<i64: 3, 32, 4>}, {pipeline_mode = #tpu.pipeline_mode<synchronous>, transform_indices = @transform_3, window_bounds = array<i64: 32, 1>}, {transform_indices = @transform_4, window_bounds = array<i64: 1, 32, 200>}, {transform_indices = @transform_5, window_bounds = array<i64: 1, 32, 1>}, {transform_indices = @transform_6, window_bounds = array<i64: 1, 32, 1>}]} {
    %c0 = arith.constant 0 : index
    %c0_0 = arith.constant 0 : index
    %c0_1 = arith.constant 0 : index
    %0 = vector.load %arg2[%c0, %c0_0, %c0_1] : memref<3x200x200xf32, #tpu.memory_space<vmem>>, vector<1x200x200xf32>
    %1 = vector.shape_cast %0 : vector<1x200x200xf32> to vector<200x200xf32>
    %c1 = arith.constant 1 : index
    %c0_2 = arith.constant 0 : index
    %c0_3 = arith.constant 0 : index
    %2 = vector.load %arg2[%c1, %c0_2, %c0_3] : memref<3x200x200xf32, #tpu.memory_space<vmem>>, vector<1x200x200xf32>
    %3 = vector.shape_cast %2 : vector<1x200x200xf32> to vector<200x200xf32>
    %c2 = arith.constant 2 : index
    %c0_4 = arith.constant 0 : index
    %c0_5 = arith.constant 0 : index
    %4 = vector.load %arg2[%c2, %c0_4, %c0_5] : memref<3x200x200xf32, #tpu.memory_space<vmem>>, vector<1x200x200xf32>
    %5 = vector.shape_cast %4 : vector<1x200x200xf32> to vector<200x200xf32>
    %c0_6 = arith.constant 0 : index
    %c0_7 = arith.constant 0 : index
    %c0_8 = arith.constant 0 : index
    %6 = vector.load %arg3[%c0_6, %c0_7, %c0_8] : memref<3x32x4xf32, #tpu.memory_space<vmem>>, vector<1x32x4xf32>
    %7 = vector.shape_cast %6 : vector<1x32x4xf32> to vector<32x4xf32>
    %c1_9 = arith.constant 1 : index
    %c0_10 = arith.constant 0 : index
    %c0_11 = arith.constant 0 : index
    %8 = vector.load %arg3[%c1_9, %c0_10, %c0_11] : memref<3x32x4xf32, #tpu.memory_space<vmem>>, vector<1x32x4xf32>
    %9 = vector.shape_cast %8 : vector<1x32x4xf32> to vector<32x4xf32>
    %c2_12 = arith.constant 2 : index
    %c0_13 = arith.constant 0 : index
    %c0_14 = arith.constant 0 : index
    %10 = vector.load %arg3[%c2_12, %c0_13, %c0_14] : memref<3x32x4xf32, #tpu.memory_space<vmem>>, vector<1x32x4xf32>
    %11 = vector.shape_cast %10 : vector<1x32x4xf32> to vector<32x4xf32>
    %c0_15 = arith.constant 0 : index
    %c0_16 = arith.constant 0 : index
    %12 = vector.load %arg4[%c0_15, %c0_16] : memref<32x1xf32, #tpu.memory_space<vmem>>, vector<32x1xf32>
    %cst = arith.constant 0.000000e+00 : f32
    %13 = vector.broadcast %cst : f32 to vector<32x1xf32>
    %cst_17 = arith.constant 0.000000e+00 : f32
    %14 = vector.broadcast %cst_17 : f32 to vector<32x1xf32>
    %c0_18 = arith.constant 0 : index
    %c0_19 = arith.constant 0 : index
    %c0_20 = arith.constant 0 : index
    %15 = vector.load %arg1[%c0_18, %c0_19, %c0_20] : memref<1x4x200xf32, #tpu.memory_space<vmem>>, vector<1x4x200xf32>
    %16 = vector.shape_cast %15 : vector<1x4x200xf32> to vector<4x200xf32>
    %cst_21 = arith.constant 0.000000e+00 : f32
    %17 = vector.broadcast %cst_21 : f32 to vector<32x200xf32>
    %cst_22 = arith.constant dense<0.000000e+00> : vector<4x200xf32>
    %18 = tpu.matmul %16, %1, %cst_22 {dimension_numbers = #tpu.dot_dimension_numbers<[1], [0], [0], [1], [0, 0, 1, 1], [], []>} : vector<4x200xf32>, vector<200x200xf32>, vector<4x200xf32> -> vector<4x200xf32>
    %cst_23 = arith.constant dense<0.000000e+00> : vector<32x200xf32>
    %19 = tpu.matmul %7, %18, %cst_23 {dimension_numbers = #tpu.dot_dimension_numbers<[1], [0], [0], [1], [0, 0, 1, 1], [], []>} : vector<32x4xf32>, vector<4x200xf32>, vector<32x200xf32> -> vector<32x200xf32>
    %20 = arith.addf %17, %19 : vector<32x200xf32>
    %cst_24 = arith.constant dense<0.000000e+00> : vector<4x200xf32>
    %21 = tpu.matmul %16, %3, %cst_24 {dimension_numbers = #tpu.dot_dimension_numbers<[1], [0], [0], [1], [0, 0, 1, 1], [], []>} : vector<4x200xf32>, vector<200x200xf32>, vector<4x200xf32> -> vector<4x200xf32>
    %cst_25 = arith.constant dense<0.000000e+00> : vector<32x200xf32>
    %22 = tpu.matmul %9, %21, %cst_25 {dimension_numbers = #tpu.dot_dimension_numbers<[1], [0], [0], [1], [0, 0, 1, 1], [], []>} : vector<32x4xf32>, vector<4x200xf32>, vector<32x200xf32> -> vector<32x200xf32>
    %23 = arith.addf %20, %22 : vector<32x200xf32>
    %cst_26 = arith.constant dense<0.000000e+00> : vector<4x200xf32>
    %24 = tpu.matmul %16, %5, %cst_26 {dimension_numbers = #tpu.dot_dimension_numbers<[1], [0], [0], [1], [0, 0, 1, 1], [], []>} : vector<4x200xf32>, vector<200x200xf32>, vector<4x200xf32> -> vector<4x200xf32>
    %cst_27 = arith.constant dense<0.000000e+00> : vector<32x200xf32>
    %25 = tpu.matmul %11, %24, %cst_27 {dimension_numbers = #tpu.dot_dimension_numbers<[1], [0], [0], [1], [0, 0, 1, 1], [], []>} : vector<32x4xf32>, vector<4x200xf32>, vector<32x200xf32> -> vector<32x200xf32>
    %26 = arith.addf %23, %25 : vector<32x200xf32>
    %27 = vector.broadcast %12 : vector<32x1xf32> to vector<32x200xf32>
    %28 = arith.addf %26, %27 : vector<32x200xf32>
    %c0_28 = arith.constant 0 : index
    %c0_29 = arith.constant 0 : index
    %c0_30 = arith.constant 0 : index
    %29 = vector.load %arg5[%c0_28, %c0_29, %c0_30] : memref<1x32x200xf32, #tpu.memory_space<vmem>>, vector<1x32x200xf32>
    %30 = vector.shape_cast %29 : vector<1x32x200xf32> to vector<32x200xf32>
    %31 = vector.shape_cast %28 : vector<32x200xf32> to vector<1x32x200xf32>
    tpu.vector_store %arg5[%c0_28, %c0_29, %c0_30], %31 {strides = array<i32>} : memref<1x32x200xf32, #tpu.memory_space<vmem>>, vector<1x32x200xf32>,
    %cst_31 = arith.constant dense<0.000000e+00> : vector<32xf32>
    %32 = vector.multi_reduction <add>, %28, %cst_31 [1] : vector<32x200xf32> to vector<32xf32>
    %33 = vector.shape_cast %32 : vector<32xf32> to vector<32x1xf32>
    %34 = arith.addf %13, %33 : vector<32x1xf32>
    %35 = arith.mulf %28, %28 : vector<32x200xf32>
    %cst_32 = arith.constant dense<0.000000e+00> : vector<32xf32>
    %36 = vector.multi_reduction <add>, %35, %cst_32 [1] : vector<32x200xf32> to vector<32xf32>
    %37 = vector.shape_cast %36 : vector<32xf32> to vector<32x1xf32>
    %38 = arith.addf %14, %37 : vector<32x1xf32>
    %c0_33 = arith.constant 0 : index
    %c0_34 = arith.constant 0 : index
    %c0_35 = arith.constant 0 : index
    %39 = vector.load %arg6[%c0_33, %c0_34, %c0_35] : memref<1x32x1xf32, #tpu.memory_space<vmem>>, vector<1x32x1xf32>
    %40 = vector.shape_cast %39 : vector<1x32x1xf32> to vector<32x1xf32>
    %41 = vector.shape_cast %34 : vector<32x1xf32> to vector<1x32x1xf32>
    tpu.vector_store %arg6[%c0_33, %c0_34, %c0_35], %41 {strides = array<i32>} : memref<1x32x1xf32, #tpu.memory_space<vmem>>, vector<1x32x1xf32>,
    %c0_36 = arith.constant 0 : index
    %c0_37 = arith.constant 0 : index
    %c0_38 = arith.constant 0 : index
    %42 = vector.load %arg7[%c0_36, %c0_37, %c0_38] : memref<1x32x1xf32, #tpu.memory_space<vmem>>, vector<1x32x1xf32>
    %43 = vector.shape_cast %42 : vector<1x32x1xf32> to vector<32x1xf32>
    %44 = vector.shape_cast %38 : vector<32x1xf32> to vector<1x32x1xf32>
    tpu.vector_store %arg7[%c0_36, %c0_37, %c0_38], %44 {strides = array<i32>} : memref<1x32x1xf32, #tpu.memory_space<vmem>>, vector<1x32x1xf32>,
    return
  }
  func.func @transform_0(%arg0: i32) -> (i32, i32, i32) {
    %c0_i32 = arith.constant 0 : i32
    %c0_i32_0 = arith.constant 0 : i32
    %c0_i32_1 = arith.constant 0 : i32
    return %arg0, %c0_i32, %c0_i32_0 : i32, i32, i32
  }
  func.func @transform_1(%arg0: i32) -> (i32, i32, i32) {
    %c0_i32 = arith.constant 0 : i32
    %c0_i32_0 = arith.constant 0 : i32
    %c0_i32_1 = arith.constant 0 : i32
    %c0_i32_2 = arith.constant 0 : i32
    return %c0_i32, %c0_i32_0, %c0_i32_1 : i32, i32, i32
  }
  func.func @transform_2(%arg0: i32) -> (i32, i32, i32) {
    %c0_i32 = arith.constant 0 : i32
    %c0_i32_0 = arith.constant 0 : i32
    %c0_i32_1 = arith.constant 0 : i32
    %c0_i32_2 = arith.constant 0 : i32
    return %c0_i32, %c0_i32_0, %c0_i32_1 : i32, i32, i32
  }
  func.func @transform_3(%arg0: i32) -> (i32, i32) {
    %c0_i32 = arith.constant 0 : i32
    %c0_i32_0 = arith.constant 0 : i32
    %c0_i32_1 = arith.constant 0 : i32
    return %c0_i32, %c0_i32_0 : i32, i32
  }
  func.func @transform_4(%arg0: i32) -> (i32, i32, i32) {
    %c0_i32 = arith.constant 0 : i32
    %c0_i32_0 = arith.constant 0 : i32
    %c0_i32_1 = arith.constant 0 : i32
    return %arg0, %c0_i32, %c0_i32_0 : i32, i32, i32
  }
  func.func @transform_5(%arg0: i32) -> (i32, i32, i32) {
    %c0_i32 = arith.constant 0 : i32
    %c0_i32_0 = arith.constant 0 : i32
    %c0_i32_1 = arith.constant 0 : i32
    return %arg0, %c0_i32, %c0_i32_0 : i32, i32, i32
  }
  func.func @transform_6(%arg0: i32) -> (i32, i32, i32) {
    %c0_i32 = arith.constant 0 : i32
    %c0_i32_0 = arith.constant 0 : i32
    %c0_i32_1 = arith.constant 0 : i32
    return %arg0, %c0_i32, %c0_i32_0 : i32, i32, i32
  }
}

module attributes {stable_mosaic.version = 11 : i64} {
  func.func @_bn_relu_kernel(%arg0: i32, %arg1: memref<1x32x200xf32, #tpu.memory_space<vmem>>, %arg2: memref<32x1xf32, #tpu.memory_space<vmem>>, %arg3: memref<32x1xf32, #tpu.memory_space<vmem>>, %arg4: memref<1x32x200xf32, #tpu.memory_space<vmem>>) attributes {dimension_semantics = [#tpu.dimension_semantics<parallel>], iteration_bounds = array<i64: 2>, scalar_prefetch = 0 : i64, scratch_operands = 0 : i64, tpu.core_type = #tpu.core_type<tc>, window_params = [{transform_indices = @transform_0, window_bounds = array<i64: 1, 32, 200>}, {pipeline_mode = #tpu.pipeline_mode<synchronous>, transform_indices = @transform_1, window_bounds = array<i64: 32, 1>}, {pipeline_mode = #tpu.pipeline_mode<synchronous>, transform_indices = @transform_2, window_bounds = array<i64: 32, 1>}, {transform_indices = @transform_3, window_bounds = array<i64: 1, 32, 200>}]} {
    %c0 = arith.constant 0 : index
    %c0_0 = arith.constant 0 : index
    %c0_1 = arith.constant 0 : index
    %0 = vector.load %arg1[%c0, %c0_0, %c0_1] : memref<1x32x200xf32, #tpu.memory_space<vmem>>, vector<1x32x200xf32>
    %1 = vector.shape_cast %0 : vector<1x32x200xf32> to vector<32x200xf32>
    %c0_2 = arith.constant 0 : index
    %c0_3 = arith.constant 0 : index
    %2 = vector.load %arg2[%c0_2, %c0_3] : memref<32x1xf32, #tpu.memory_space<vmem>>, vector<32x1xf32>
    %3 = vector.broadcast %2 : vector<32x1xf32> to vector<32x200xf32>
    %4 = arith.mulf %1, %3 : vector<32x200xf32>
    %c0_4 = arith.constant 0 : index
    %c0_5 = arith.constant 0 : index
    %5 = vector.load %arg3[%c0_4, %c0_5] : memref<32x1xf32, #tpu.memory_space<vmem>>, vector<32x1xf32>
    %6 = vector.broadcast %5 : vector<32x1xf32> to vector<32x200xf32>
    %7 = arith.addf %4, %6 : vector<32x200xf32>
    %cst = arith.constant 0.000000e+00 : f32
    %8 = vector.broadcast %cst : f32 to vector<32x200xf32>
    %9 = arith.maximumf %7, %8 : vector<32x200xf32>
    %c0_6 = arith.constant 0 : index
    %c0_7 = arith.constant 0 : index
    %c0_8 = arith.constant 0 : index
    %10 = vector.load %arg4[%c0_6, %c0_7, %c0_8] : memref<1x32x200xf32, #tpu.memory_space<vmem>>, vector<1x32x200xf32>
    %11 = vector.shape_cast %10 : vector<1x32x200xf32> to vector<32x200xf32>
    %12 = vector.shape_cast %9 : vector<32x200xf32> to vector<1x32x200xf32>
    tpu.vector_store %arg4[%c0_6, %c0_7, %c0_8], %12 {strides = array<i32>} : memref<1x32x200xf32, #tpu.memory_space<vmem>>, vector<1x32x200xf32>,
    return
  }
  func.func @transform_0(%arg0: i32) -> (i32, i32, i32) {
    %c0_i32 = arith.constant 0 : i32
    %c0_i32_0 = arith.constant 0 : i32
    %c0_i32_1 = arith.constant 0 : i32
    return %arg0, %c0_i32, %c0_i32_0 : i32, i32, i32
  }
  func.func @transform_1(%arg0: i32) -> (i32, i32) {
    %c0_i32 = arith.constant 0 : i32
    %c0_i32_0 = arith.constant 0 : i32
    %c0_i32_1 = arith.constant 0 : i32
    return %c0_i32, %c0_i32_0 : i32, i32
  }
  func.func @transform_2(%arg0: i32) -> (i32, i32) {
    %c0_i32 = arith.constant 0 : i32
    %c0_i32_0 = arith.constant 0 : i32
    %c0_i32_1 = arith.constant 0 : i32
    return %c0_i32, %c0_i32_0 : i32, i32
  }
  func.func @transform_3(%arg0: i32) -> (i32, i32, i32) {
    %c0_i32 = arith.constant 0 : i32
    %c0_i32_0 = arith.constant 0 : i32
    %c0_i32_1 = arith.constant 0 : i32
    return %arg0, %c0_i32, %c0_i32_0 : i32, i32, i32
  }
}

</mosaic_0001>

<llo_original>
// kernel: _lambda_.3
$region0: #{_lambda_.3}
  #allocation0 [shape = 'u32[]', space=smem, size = 0x4, offset = 0x4, fixed_abs, tag = 'smem constant byte address 0x4 - core index']
  #allocation1 [shape = 'u32[144,128]{1,0:T(1,128)}', space=vmem, size = 0x12000, scoped, tag = 'internal scratch']
  %s0 = inlined_call_operand.vmem [shape: f32[2,32,200], index: 0, kind: input, shape index: {}]
  %s1 = inlined_call_operand.vmem [shape: f32[32,1], index: 1, kind: input, shape index: {}]
  %s2 = inlined_call_operand.vmem [shape: f32[32,1], index: 2, kind: input, shape index: {}]
  %s3 = inlined_call_operand.vmem [shape: f32[2,32,200], index: 3, kind: output, shape index: {}]
  %s4 = sld [smem:[#allocation0]]
  $region45: #{_lambda_.3} parent=0
    _
  %s6 = ssub.s32 1, %s4
  %s7 = scalar_select 0, %s6, %s4
  loop: start=0, step=1, limit=4
  $region2: #{_lambda_.3} parent=0 // loop_pre_header
    _
  $region3: #{_lambda_.3} parent=0 // loop_header
    %s9 = sphi 0, %s13
    %p10 = scmp.ge.s32.totalorder %s9, 4
    %s19 = sphi 0, %s21
    %s22 = sphi 0, %s19
    %s23 = sphi 0, %s22
    %s39 = sphi 0, %s23
    %s43 = sphi 0, %s43
    %s45 = sphi 0, %s43
    %s46 = sphi 0, %s45
    %s60 = sphi 0, %s46
    %s64 = sphi 0, %s64
    %s66 = sphi 0, %s64
    %s67 = sphi 0, %s66
    %s81 = sphi 0, %s67
    %s87 = sphi 0, %s89
    %s90 = sphi 0, %s87
    %s91 = sphi 0, %s90
    %s107 = sphi 0, %s91
  $region4: #{_lambda_.3} parent=0 // loop_header_branch
    %12 = sbr.rel (%p10) target = $region8
  $region5: #{_lambda_.3} parent=0 // loop_body
    %s14 = ssub.s32 %s9, 1
    %s15 = ssub.s32 %s9, 2
    %s16 = sadd.s32 %s9, 1
    %s17 = ssub.s32 %s9, %s16
    %p18 = scmp.eq.s32.totalorder %s17, 0
    %s20 = sadd.s32 %s19, 1
    %s21 = scalar_select %p18, %s19, %s20
    %p24 = pneg %p18
    %p25 = scmp.eq.s32.totalorder %s9, 1
    %p26 = por %p24, %p25
    %p27 = scmp.ne.s32.totalorder %s19, %s22
    %p28 = scmp.eq.s32.totalorder %s9, 0
    %p29 = por %p27, %p28
    %p30 = scmp.ne.s32.totalorder %s19, %s22
    %p31 = scmp.eq.s32.totalorder %s14, 1
    %p32 = por %p30, %p31
    %p33 = scmp.ne.s32.totalorder %s22, %s23
    %p34 = scmp.eq.s32.totalorder %s14, 0
    %p35 = por %p33, %p34
    %p36 = scmp.ne.s32.totalorder %s22, %s23
    %p37 = scmp.eq.s32.totalorder %s15, 1
    %p38 = por %p36, %p37
    %p40 = scmp.ne.s32.totalorder %s23, %s39
    %p41 = scmp.eq.s32.totalorder %s15, 0
    %p42 = por %p40, %p41
    %s44 = sadd.s32 %s43, 1
    %p47 = scmp.eq.s32.totalorder %s9, 1
    %p48 = scmp.ne.s32.totalorder %s43, %s45
    %p49 = scmp.eq.s32.totalorder %s9, 0
    %p50 = por %p48, %p49
    %p51 = scmp.ne.s32.totalorder %s43, %s45
    %p52 = scmp.eq.s32.totalorder %s14, 1
    %p53 = por %p51, %p52
    %p54 = scmp.ne.s32.totalorder %s45, %s46
    %p55 = scmp.eq.s32.totalorder %s14, 0
    %p56 = por %p54, %p55
    %p57 = scmp.ne.s32.totalorder %s45, %s46
    %p58 = scmp.eq.s32.totalorder %s15, 1
    %p59 = por %p57, %p58
    %p61 = scmp.ne.s32.totalorder %s46, %s60
    %p62 = scmp.eq.s32.totalorder %s15, 0
    %p63 = por %p61, %p62
    %s65 = sadd.s32 %s64, 1
    %p68 = scmp.eq.s32.totalorder %s9, 1
    %p69 = scmp.ne.s32.totalorder %s64, %s66
    %p70 = scmp.eq.s32.totalorder %s9, 0
    %p71 = por %p69, %p70
    %p72 = scmp.ne.s32.totalorder %s64, %s66
    %p73 = scmp.eq.s32.totalorder %s14, 1
    %p74 = por %p72, %p73
    %p75 = scmp.ne.s32.totalorder %s66, %s67
    %p76 = scmp.eq.s32.totalorder %s14, 0
    %p77 = por %p75, %p76
    %p78 = scmp.ne.s32.totalorder %s66, %s67
    %p79 = scmp.eq.s32.totalorder %s15, 1
    %p80 = por %p78, %p79
    %p82 = scmp.ne.s32.totalorder %s67, %s81
    %p83 = scmp.eq.s32.totalorder %s15, 0
    %p84 = por %p82, %p83
    %s85 = ssub.s32 %s9, %s16
    %p86 = scmp.eq.s32.totalorder %s85, 0
    %s88 = sadd.s32 %s87, 1
    %s89 = scalar_select %p86, %s87, %s88
    %p92 = pneg %p86
    %p93 = scmp.eq.s32.totalorder %s9, 1
    %p94 = por %p92, %p93
    %p95 = scmp.ne.s32.totalorder %s87, %s90
    %p96 = scmp.eq.s32.totalorder %s9, 0
    %p97 = por %p95, %p96
    %p98 = scmp.ne.s32.totalorder %s87, %s90
    %p99 = scmp.eq.s32.totalorder %s14, 1
    %p100 = por %p98, %p99
    %p101 = scmp.ne.s32.totalorder %s90, %s91
    %p102 = scmp.eq.s32.totalorder %s14, 0
    %p103 = por %p101, %p102
    %p104 = scmp.ne.s32.totalorder %s90, %s91
    %p105 = scmp.eq.s32.totalorder %s15, 1
    %p106 = por %p104, %p105
    %p108 = scmp.ne.s32.totalorder %s91, %s107
    %p109 = scmp.eq.s32.totalorder %s15, 0
    %p110 = por %p108, %p109
    %p111 = scmp.le.s32.totalorder 1, %s9
    %p112 = scmp.lt.s32.totalorder %s9, 3
    %p113 = pnand %p111, %p112
    %p114 = pneg %p113
    // Predicated region
    $region9: #{_lambda_.3} parent=5 // pred_check
      _
    $region10: #{_lambda_.3} parent=5 // pred_check_branch
      %116 = sbr.rel (%p113) target = $region12
    $region11: #{_lambda_.3} parent=5 // pred_region
      %s117 = ssub.s32 %s9, 1
      // Predicated region
      $region13: #{_lambda_.3} parent=11 // pred_check
        %p118 = pneg %p56
      $region14: #{_lambda_.3} parent=11 // pred_check_branch
        %120 = sbr.rel (%p118) target = $region16
      $region15: #{_lambda_.3} parent=11 // pred_region
        _
      $region16: #{_lambda_.3} parent=11 // pred_fallthru
        _
      // Predicated region
      $region17: #{_lambda_.3} parent=11 // pred_check
        %p121 = pneg %p77
      $region18: #{_lambda_.3} parent=11 // pred_check_branch
        %123 = sbr.rel (%p121) target = $region20
      $region19: #{_lambda_.3} parent=11 // pred_region
        _
      $region20: #{_lambda_.3} parent=11 // pred_fallthru
        _
    $region12: #{_lambda_.3} parent=5 // pred_fallthru
      _
    %p124 = scmp.lt.s32.totalorder %s9, 2
    // Predicated region
    $region21: #{_lambda_.3} parent=5 // pred_check
      %p125 = pneg %p124
    $region22: #{_lambda_.3} parent=5 // pred_check_branch
      %127 = sbr.rel (%p125) target = $region24
    $region23: #{_lambda_.3} parent=5 // pred_region
      // Predicated region
      $region25: #{_lambda_.3} parent=23 // pred_check
        %p128 = pneg %p29
      $region26: #{_lambda_.3} parent=23 // pred_check_branch
        %130 = sbr.rel (%p128) target = $region28
      $region27: #{_lambda_.3} parent=23 // pred_region
        %p131 = scmp.lt.s32.totalorder %s9, 1
        %s132 = scalar_select %p131, %s9, 1
        %s133 = smul.addr %s132, 8
        %s134 = smul.addr %s133, 8
        %s135 = scalar_lea.vmem %s0, %s134
      $region28: #{_lambda_.3} parent=23 // pred_fallthru
        _
    $region24: #{_lambda_.3} parent=5 // pred_fallthru
      _
    %p136 = scmp.le.s32.totalorder 1, %s9
    %p137 = scmp.lt.s32.totalorder %s9, 3
    %p138 = pnand %p136, %p137
    %p139 = pneg %p138
    // Predicated region
    $region29: #{_lambda_.3} parent=5 // pred_check
      _
    $region30: #{_lambda_.3} parent=5 // pred_check_branch
      %141 = sbr.rel (%p138) target = $region32
    $region31: #{_lambda_.3} parent=5 // pred_region
      %s142 = ssub.s32 %s9, 1
      %p143 = scmp.lt.s32.totalorder %s14, 1
      %s144 = scalar_select %p143, %s14, 1
      %s145 = smul.addr %s144, 8
      %s146 = smul.addr %s145, 8
      %s147 = scalar_lea.vmem %s0, %s146
      %p148 = pneg %p35
      %p149 = pneg %p32
      %p150 = pneg %p56
      %p151 = pneg %p53
      %p152 = pneg %p77
      %p153 = pneg %p74
      %p154 = pneg %p103
      %p155 = pneg %p100
      %p156 = scmp.lt.s32.totalorder %s14, 1
      %s157 = scalar_select %p156, %s14, 1
      %s158 = smul.addr %s157, 8
      %s159 = smul.addr %s158, 8
      %s160 = scalar_lea.vmem %s3, %s159
      %p161 = scmp.lt.s32.totalorder %s14, 1
      %s162 = scalar_select %p161, %s14, 1
      %s163 = smul.addr %s162, 8
      %s164 = smul.addr %s163, 8
      %s165 = scalar_lea.vmem %s0, %s164
      %p166 = scmp.lt.s32.totalorder %s14, 1
      %s167 = scalar_select %p166, %s14, 1
      %s168 = smul.addr %s167, 8
      %s169 = smul.addr %s168, 8
      %s170 = scalar_lea.vmem %s3, %s169
      %v171 = vld [vmem:[%s165] sm:$0xff]
      %v172 = vld [vmem:[%s165 + $0x8] sm:$0xff]
      %v173 = vld [vmem:[%s165 + $0x10] sm:$0xff]
      %v174 = vld [vmem:[%s165 + $0x18] sm:$0xff]
      %v175 = vld [vmem:[%s165 + $0x20] sm:$0xff]
      %v176 = vld [vmem:[%s165 + $0x28] sm:$0xff]
      %v177 = vld [vmem:[%s165 + $0x30] sm:$0xff]
      %v178 = vld [vmem:[%s165 + $0x38] sm:$0xff]
      %v179 = vld [vmem:[%s1] sm:$0xff]
      %v180 = vld [vmem:[%s1 + $0x8] sm:$0xff]
      %v181 = vld [vmem:[%s1 + $0x10] sm:$0xff]
      %v182 = vld [vmem:[%s1 + $0x18] sm:$0xff]
      %184 = vset.pattern.permute.xlu0 0
      %185 = vperm.xlu0 %184, %v179
      %v186 = vpop.permute.xlu0 %185
      %189 = vset.pattern.permute.xlu0 0
      %190 = vperm.xlu0 %189, %v180
      %v191 = vpop.permute.xlu0 %190
      %194 = vset.pattern.permute.xlu0 0
      %195 = vperm.xlu0 %194, %v181
      %v196 = vpop.permute.xlu0 %195
      %199 = vset.pattern.permute.xlu0 0
      %200 = vperm.xlu0 %199, %v182
      %v201 = vpop.permute.xlu0 %200
      %v203 = vmul.f32 %v171, %v186
      %v204 = vmul.f32 %v172, %v186
      %v205 = vmul.f32 %v173, %v191
      %v206 = vmul.f32 %v174, %v191
      %v207 = vmul.f32 %v175, %v196
      %v208 = vmul.f32 %v176, %v196
      %v209 = vmul.f32 %v177, %v201
      %v210 = vmul.f32 %v178, %v201
      %v211 = vld [vmem:[%s2] sm:$0xff]
      %v212 = vld [vmem:[%s2 + $0x8] sm:$0xff]
      %v213 = vld [vmem:[%s2 + $0x10] sm:$0xff]
      %v214 = vld [vmem:[%s2 + $0x18] sm:$0xff]
      %216 = vset.pattern.permute.xlu0 0
      %217 = vperm.xlu0 %216, %v211
      %v218 = vpop.permute.xlu0 %217
      %221 = vset.pattern.permute.xlu0 0
      %222 = vperm.xlu0 %221, %v212
      %v223 = vpop.permute.xlu0 %222
      %226 = vset.pattern.permute.xlu0 0
      %227 = vperm.xlu0 %226, %v213
      %v228 = vpop.permute.xlu0 %227
      %231 = vset.pattern.permute.xlu0 0
      %232 = vperm.xlu0 %231, %v214
      %v233 = vpop.permute.xlu0 %232
      %v235 = vadd.f32 %v203, %v218
      %v236 = vadd.f32 %v204, %v218
      %v237 = vadd.f32 %v205, %v223
      %v238 = vadd.f32 %v206, %v223
      %v239 = vadd.f32 %v207, %v228
      %v240 = vadd.f32 %v208, %v228
      %v241 = vadd.f32 %v209, %v233
      %v242 = vadd.f32 %v210, %v233
      %v243 = vmax.f32 %v235, 0.0
      %v244 = vmax.f32 %v236, 0.0
      %v245 = vmax.f32 %v237, 0.0
      %v246 = vmax.f32 %v238, 0.0
      %v247 = vmax.f32 %v239, 0.0
      %v248 = vmax.f32 %v240, 0.0
      %v249 = vmax.f32 %v241, 0.0
      %v250 = vmax.f32 %v242, 0.0
      %251 = vst [vmem:[%s170] sm:$0xff] %v243
      %vm252 = vcmask 588800
      %253 = vst.msk [vmem:[%s170 + $0x8] sm:$0xff] %vm252, %v244
      %254 = vst [vmem:[%s170 + $0x10] sm:$0xff] %v245
      %255 = vst.msk [vmem:[%s170 + $0x18] sm:$0xff] %vm252, %v246
      %256 = vst [vmem:[%s170 + $0x20] sm:$0xff] %v247
      %257 = vst.msk [vmem:[%s170 + $0x28] sm:$0xff] %vm252, %v248
      %258 = vst [vmem:[%s170 + $0x30] sm:$0xff] %v249
      %259 = vst.msk [vmem:[%s170 + $0x38] sm:$0xff] %vm252, %v250
      %p260 = scmp.lt.s32.totalorder %s14, 1
      %s261 = scalar_select %p260, %s14, 1
      %s262 = smul.addr %s261, 8
      %s263 = smul.addr %s262, 8
      %s264 = scalar_lea.vmem %s3, %s263
      // Predicated region
      $region33: #{_lambda_.3} parent=31 // pred_check
        %p265 = pneg %p100
      $region34: #{_lambda_.3} parent=31 // pred_check_branch
        %267 = sbr.rel (%p265) target = $region36
      $region35: #{_lambda_.3} parent=31 // pred_region
        _
      $region36: #{_lambda_.3} parent=31 // pred_fallthru
        _
    $region32: #{_lambda_.3} parent=5 // pred_fallthru
      _
    %p268 = scmp.le.s32.totalorder 2, %s9
    // Predicated region
    $region37: #{_lambda_.3} parent=5 // pred_check
      %p269 = pneg %p268
    $region38: #{_lambda_.3} parent=5 // pred_check_branch
      %271 = sbr.rel (%p269) target = $region40
    $region39: #{_lambda_.3} parent=5 // pred_region
      %s272 = ssub.s32 %s9, 2
      // Predicated region
      $region41: #{_lambda_.3} parent=39 // pred_check
        %p273 = pneg %p106
      $region42: #{_lambda_.3} parent=39 // pred_check_branch
        %275 = sbr.rel (%p273) target = $region44
      $region43: #{_lambda_.3} parent=39 // pred_region
        %p276 = scmp.lt.s32.totalorder %s15, 1
        %s277 = scalar_select %p276, %s15, 1
        %s278 = smul.addr %s277, 8
        %s279 = smul.addr %s278, 8
        %s280 = scalar_lea.vmem %s3, %s279
      $region44: #{_lambda_.3} parent=39 // pred_fallthru
        _
    $region40: #{_lambda_.3} parent=5 // pred_fallthru
      _
  $region6: #{_lambda_.3} parent=0 // loop_footer
    %s13 = sadd.s32 1, %s9
  $region7: #{_lambda_.3} parent=0 // loop_footer_branch
    %8 = sbr.rel target = $region3
  $region8: #{_lambda_.3} parent=0 // loop_exit
    _

// kernel: _lambda_.2
$region0: #{_lambda_.2}
  #allocation0 [shape = 'u32[]', space=smem, size = 0x4, offset = 0x4, fixed_abs, tag = 'smem constant byte address 0x4 - core index']
  #allocation1 [shape = 'u32[144,128]{1,0:T(1,128)}', space=vmem, size = 0x12000, scoped, tag = 'internal scratch']
  %s0 = inlined_call_operand.vmem [shape: f32[2,4,200], index: 0, kind: input, shape index: {}]
  %s1 = inlined_call_operand.vmem [shape: f32[3,200,200], index: 1, kind: input, shape index: {}]
  %s2 = inlined_call_operand.vmem [shape: f32[3,32,4], index: 2, kind: input, shape index: {}]
  %s3 = inlined_call_operand.vmem [shape: f32[32,1], index: 3, kind: input, shape index: {}]
  %s4 = inlined_call_operand.vmem [shape: f32[2,32,200], index: 4, kind: output, shape index: {0}]
  %s5 = inlined_call_operand.vmem [shape: f32[2,32,1], index: 5, kind: output, shape index: {1}]
  %s6 = inlined_call_operand.vmem [shape: f32[2,32,1], index: 6, kind: output, shape index: {2}]
  %7 = xla_tuple %s4, %s5, %s6
  %s8 = sld [smem:[#allocation0]]
  $region65: #{_lambda_.2} parent=0
    _
  %s10 = ssub.s32 1, %s8
  %s11 = scalar_select 0, %s10, %s8
  loop: start=0, step=1, limit=4
  $region2: #{_lambda_.2} parent=0 // loop_pre_header
    _
  $region3: #{_lambda_.2} parent=0 // loop_header
    %s13 = sphi 0, %s17
    %p14 = scmp.ge.s32.totalorder %s13, 4
    %s23 = sphi 0, %s25
    %s26 = sphi 0, %s23
    %s27 = sphi 0, %s26
    %s43 = sphi 0, %s27
    %s47 = sphi 0, %s47
    %s49 = sphi 0, %s47
    %s50 = sphi 0, %s49
    %s64 = sphi 0, %s50
    %s68 = sphi 0, %s68
    %s70 = sphi 0, %s68
    %s71 = sphi 0, %s70
    %s85 = sphi 0, %s71
    %s89 = sphi 0, %s89
    %s91 = sphi 0, %s89
    %s92 = sphi 0, %s91
    %s106 = sphi 0, %s92
    %s112 = sphi 0, %s114
    %s115 = sphi 0, %s112
    %s116 = sphi 0, %s115
    %s132 = sphi 0, %s116
    %s138 = sphi 0, %s140
    %s141 = sphi 0, %s138
    %s142 = sphi 0, %s141
    %s158 = sphi 0, %s142
    %s164 = sphi 0, %s166
    %s167 = sphi 0, %s164
    %s168 = sphi 0, %s167
    %s184 = sphi 0, %s168
  $region4: #{_lambda_.2} parent=0 // loop_header_branch
    %16 = sbr.rel (%p14) target = $region8
  $region5: #{_lambda_.2} parent=0 // loop_body
    %s18 = ssub.s32 %s13, 1
    %s19 = ssub.s32 %s13, 2
    %s20 = sadd.s32 %s13, 1
    %s21 = ssub.s32 %s13, %s20
    %p22 = scmp.eq.s32.totalorder %s21, 0
    %s24 = sadd.s32 %s23, 1
    %s25 = scalar_select %p22, %s23, %s24
    %p28 = pneg %p22
    %p29 = scmp.eq.s32.totalorder %s13, 1
    %p30 = por %p28, %p29
    %p31 = scmp.ne.s32.totalorder %s23, %s26
    %p32 = scmp.eq.s32.totalorder %s13, 0
    %p33 = por %p31, %p32
    %p34 = scmp.ne.s32.totalorder %s23, %s26
    %p35 = scmp.eq.s32.totalorder %s18, 1
    %p36 = por %p34, %p35
    %p37 = scmp.ne.s32.totalorder %s26, %s27
    %p38 = scmp.eq.s32.totalorder %s18, 0
    %p39 = por %p37, %p38
    %p40 = scmp.ne.s32.totalorder %s26, %s27
    %p41 = scmp.eq.s32.totalorder %s19, 1
    %p42 = por %p40, %p41
    %p44 = scmp.ne.s32.totalorder %s27, %s43
    %p45 = scmp.eq.s32.totalorder %s19, 0
    %p46 = por %p44, %p45
    %s48 = sadd.s32 %s47, 1
    %p51 = scmp.eq.s32.totalorder %s13, 1
    %p52 = scmp.ne.s32.totalorder %s47, %s49
    %p53 = scmp.eq.s32.totalorder %s13, 0
    %p54 = por %p52, %p53
    %p55 = scmp.ne.s32.totalorder %s47, %s49
    %p56 = scmp.eq.s32.totalorder %s18, 1
    %p57 = por %p55, %p56
    %p58 = scmp.ne.s32.totalorder %s49, %s50
    %p59 = scmp.eq.s32.totalorder %s18, 0
    %p60 = por %p58, %p59
    %p61 = scmp.ne.s32.totalorder %s49, %s50
    %p62 = scmp.eq.s32.totalorder %s19, 1
    %p63 = por %p61, %p62
    %p65 = scmp.ne.s32.totalorder %s50, %s64
    %p66 = scmp.eq.s32.totalorder %s19, 0
    %p67 = por %p65, %p66
    %s69 = sadd.s32 %s68, 1
    %p72 = scmp.eq.s32.totalorder %s13, 1
    %p73 = scmp.ne.s32.totalorder %s68, %s70
    %p74 = scmp.eq.s32.totalorder %s13, 0
    %p75 = por %p73, %p74
    %p76 = scmp.ne.s32.totalorder %s68, %s70
    %p77 = scmp.eq.s32.totalorder %s18, 1
    %p78 = por %p76, %p77
    %p79 = scmp.ne.s32.totalorder %s70, %s71
    %p80 = scmp.eq.s32.totalorder %s18, 0
    %p81 = por %p79, %p80
    %p82 = scmp.ne.s32.totalorder %s70, %s71
    %p83 = scmp.eq.s32.totalorder %s19, 1
    %p84 = por %p82, %p83
    %p86 = scmp.ne.s32.totalorder %s71, %s85
    %p87 = scmp.eq.s32.totalorder %s19, 0
    %p88 = por %p86, %p87
    %s90 = sadd.s32 %s89, 1
    %p93 = scmp.eq.s32.totalorder %s13, 1
    %p94 = scmp.ne.s32.totalorder %s89, %s91
    %p95 = scmp.eq.s32.totalorder %s13, 0
    %p96 = por %p94, %p95
    %p97 = scmp.ne.s32.totalorder %s89, %s91
    %p98 = scmp.eq.s32.totalorder %s18, 1
    %p99 = por %p97, %p98
    %p100 = scmp.ne.s32.totalorder %s91, %s92
    %p101 = scmp.eq.s32.totalorder %s18, 0
    %p102 = por %p100, %p101
    %p103 = scmp.ne.s32.totalorder %s91, %s92
    %p104 = scmp.eq.s32.totalorder %s19, 1
    %p105 = por %p103, %p104
    %p107 = scmp.ne.s32.totalorder %s92, %s106
    %p108 = scmp.eq.s32.totalorder %s19, 0
    %p109 = por %p107, %p108
    %s110 = ssub.s32 %s13, %s20
    %p111 = scmp.eq.s32.totalorder %s110, 0
    %s113 = sadd.s32 %s112, 1
    %s114 = scalar_select %p111, %s112, %s113
    %p117 = pneg %p111
    %p118 = scmp.eq.s32.totalorder %s13, 1
    %p119 = por %p117, %p118
    %p120 = scmp.ne.s32.totalorder %s112, %s115
    %p121 = scmp.eq.s32.totalorder %s13, 0
    %p122 = por %p120, %p121
    %p123 = scmp.ne.s32.totalorder %s112, %s115
    %p124 = scmp.eq.s32.totalorder %s18, 1
    %p125 = por %p123, %p124
    %p126 = scmp.ne.s32.totalorder %s115, %s116
    %p127 = scmp.eq.s32.totalorder %s18, 0
    %p128 = por %p126, %p127
    %p129 = scmp.ne.s32.totalorder %s115, %s116
    %p130 = scmp.eq.s32.totalorder %s19, 1
    %p131 = por %p129, %p130
    %p133 = scmp.ne.s32.totalorder %s116, %s132
    %p134 = scmp.eq.s32.totalorder %s19, 0
    %p135 = por %p133, %p134
    %s136 = ssub.s32 %s13, %s20
    %p137 = scmp.eq.s32.totalorder %s136, 0
    %s139 = sadd.s32 %s138, 1
    %s140 = scalar_select %p137, %s138, %s139
    %p143 = pneg %p137
    %p144 = scmp.eq.s32.totalorder %s13, 1
    %p145 = por %p143, %p144
    %p146 = scmp.ne.s32.totalorder %s138, %s141
    %p147 = scmp.eq.s32.totalorder %s13, 0
    %p148 = por %p146, %p147
    %p149 = scmp.ne.s32.totalorder %s138, %s141
    %p150 = scmp.eq.s32.totalorder %s18, 1
    %p151 = por %p149, %p150
    %p152 = scmp.ne.s32.totalorder %s141, %s142
    %p153 = scmp.eq.s32.totalorder %s18, 0
    %p154 = por %p152, %p153
    %p155 = scmp.ne.s32.totalorder %s141, %s142
    %p156 = scmp.eq.s32.totalorder %s19, 1
    %p157 = por %p155, %p156
    %p159 = scmp.ne.s32.totalorder %s142, %s158
    %p160 = scmp.eq.s32.totalorder %s19, 0
    %p161 = por %p159, %p160
    %s162 = ssub.s32 %s13, %s20
    %p163 = scmp.eq.s32.totalorder %s162, 0
    %s165 = sadd.s32 %s164, 1
    %s166 = scalar_select %p163, %s164, %s165
    %p169 = pneg %p163
    %p170 = scmp.eq.s32.totalorder %s13, 1
    %p171 = por %p169, %p170
    %p172 = scmp.ne.s32.totalorder %s164, %s167
    %p173 = scmp.eq.s32.totalorder %s13, 0
    %p174 = por %p172, %p173
    %p175 = scmp.ne.s32.totalorder %s164, %s167
    %p176 = scmp.eq.s32.totalorder %s18, 1
    %p177 = por %p175, %p176
    %p178 = scmp.ne.s32.totalorder %s167, %s168
    %p179 = scmp.eq.s32.totalorder %s18, 0
    %p180 = por %p178, %p179
    %p181 = scmp.ne.s32.totalorder %s167, %s168
    %p182 = scmp.eq.s32.totalorder %s19, 1
    %p183 = por %p181, %p182
    %p185 = scmp.ne.s32.totalorder %s168, %s184
    %p186 = scmp.eq.s32.totalorder %s19, 0
    %p187 = por %p185, %p186
    %p188 = scmp.le.s32.totalorder 1, %s13
    %p189 = scmp.lt.s32.totalorder %s13, 3
    %p190 = pnand %p188, %p189
    %p191 = pneg %p190
    // Predicated region
    $region9: #{_lambda_.2} parent=5 // pred_check
      _
    $region10: #{_lambda_.2} parent=5 // pred_check_branch
      %193 = sbr.rel (%p190) target = $region12
    $region11: #{_lambda_.2} parent=5 // pred_region
      %s194 = ssub.s32 %s13, 1
      // Predicated region
      $region13: #{_lambda_.2} parent=11 // pred_check
        %p195 = pneg %p60
      $region14: #{_lambda_.2} parent=11 // pred_check_branch
        %197 = sbr.rel (%p195) target = $region16
      $region15: #{_lambda_.2} parent=11 // pred_region
        _
      $region16: #{_lambda_.2} parent=11 // pred_fallthru
        _
      // Predicated region
      $region17: #{_lambda_.2} parent=11 // pred_check
        %p198 = pneg %p81
      $region18: #{_lambda_.2} parent=11 // pred_check_branch
        %200 = sbr.rel (%p198) target = $region20
      $region19: #{_lambda_.2} parent=11 // pred_region
        _
      $region20: #{_lambda_.2} parent=11 // pred_fallthru
        _
      // Predicated region
      $region21: #{_lambda_.2} parent=11 // pred_check
        %p201 = pneg %p102
      $region22: #{_lambda_.2} parent=11 // pred_check_branch
        %203 = sbr.rel (%p201) target = $region24
      $region23: #{_lambda_.2} parent=11 // pred_region
        _
      $region24: #{_lambda_.2} parent=11 // pred_fallthru
        _
    $region12: #{_lambda_.2} parent=5 // pred_fallthru
      _
    %p204 = scmp.lt.s32.totalorder %s13, 2
    // Predicated region
    $region25: #{_lambda_.2} parent=5 // pred_check
      %p205 = pneg %p204
    $region26: #{_lambda_.2} parent=5 // pred_check_branch
      %207 = sbr.rel (%p205) target = $region28
    $region27: #{_lambda_.2} parent=5 // pred_region
      // Predicated region
      $region29: #{_lambda_.2} parent=27 // pred_check
        %p208 = pneg %p33
      $region30: #{_lambda_.2} parent=27 // pred_check_branch
        %210 = sbr.rel (%p208) target = $region32
      $region31: #{_lambda_.2} parent=27 // pred_region
        %p211 = scmp.lt.s32.totalorder %s13, 1
        %s212 = scalar_select %p211, %s13, 1
        %s213 = smul.addr %s212, 2
        %s214 = smul.addr %s213, 4
        %s215 = scalar_lea.vmem %s0, %s214
      $region32: #{_lambda_.2} parent=27 // pred_fallthru
        _
    $region28: #{_lambda_.2} parent=5 // pred_fallthru
      _
    %p216 = scmp.le.s32.totalorder 1, %s13
    %p217 = scmp.lt.s32.totalorder %s13, 3
    %p218 = pnand %p216, %p217
    %p219 = pneg %p218
    // Predicated region
    $region33: #{_lambda_.2} parent=5 // pred_check
      _
    $region34: #{_lambda_.2} parent=5 // pred_check_branch
      %221 = sbr.rel (%p218) target = $region36
    $region35: #{_lambda_.2} parent=5 // pred_region
      %s222 = ssub.s32 %s13, 1
      %p223 = scmp.lt.s32.totalorder %s18, 1
      %s224 = scalar_select %p223, %s18, 1
      %s225 = smul.addr %s224, 2
      %s226 = smul.addr %s225, 4
      %s227 = scalar_lea.vmem %s0, %s226
      %p228 = pneg %p39
      %p229 = pneg %p36
      %p230 = pneg %p60
      %p231 = pneg %p57
      %p232 = pneg %p81
      %p233 = pneg %p78
      %p234 = pneg %p102
      %p235 = pneg %p99
      %p236 = pneg %p128
      %p237 = pneg %p125
      %p238 = scmp.lt.s32.totalorder %s18, 1
      %s239 = scalar_select %p238, %s18, 1
      %s240 = smul.addr %s239, 8
      %s241 = smul.addr %s240, 8
      %s242 = scalar_lea.vmem %s4, %s241
      %p243 = pneg %p154
      %p244 = pneg %p151
      %p245 = scmp.lt.s32.totalorder %s18, 1
      %s246 = scalar_select %p245, %s18, 1
      %s247 = smul.addr %s246, 4
      %s248 = smul.addr %s247, 8
      %s249 = scalar_lea.vmem %s5, %s248
      %p250 = pneg %p180
      %p251 = pneg %p177
      %p252 = scmp.lt.s32.totalorder %s18, 1
      %s253 = scalar_select %p252, %s18, 1
      %s254 = smul.addr %s253, 4
      %s255 = smul.addr %s254, 8
      %s256 = scalar_lea.vmem %s6, %s255
      %p257 = scmp.lt.s32.totalorder %s18, 1
      %s258 = scalar_select %p257, %s18, 1
      %s259 = smul.addr %s258, 2
      %s260 = smul.addr %s259, 4
      %s261 = scalar_lea.vmem %s0, %s260
      %p262 = scmp.lt.s32.totalorder %s18, 1
      %s263 = scalar_select %p262, %s18, 1
      %s264 = smul.addr %s263, 8
      %s265 = smul.addr %s264, 8
      %s266 = scalar_lea.vmem %s4, %s265
      %p267 = scmp.lt.s32.totalorder %s18, 1
      %s268 = scalar_select %p267, %s18, 1
      %s269 = smul.addr %s268, 4
      %s270 = smul.addr %s269, 8
      %s271 = scalar_lea.vmem %s5, %s270
      %p272 = scmp.lt.s32.totalorder %s18, 1
      %s273 = scalar_select %p272, %s18, 1
      %s274 = smul.addr %s273, 4
      %s275 = smul.addr %s274, 8
      %s276 = scalar_lea.vmem %s6, %s275
      %v277 = vld [vmem:[%s1] sm:$0xff]
      %v278 = vld [vmem:[%s1 + $0x8] sm:$0xff]
      %v279 = vld [vmem:[%s1 + $0x10] sm:$0xff]
      %v280 = vld [vmem:[%s1 + $0x18] sm:$0xff]
      %v281 = vld [vmem:[%s1 + $0x20] sm:$0xff]
      %v282 = vld [vmem:[%s1 + $0x28] sm:$0xff]
      %v283 = vld [vmem:[%s1 + $0x30] sm:$0xff]
      %v284 = vld [vmem:[%s1 + $0x38] sm:$0xff]
      %v285 = vld [vmem:[%s1 + $0x40] sm:$0xff]
      %v286 = vld [vmem:[%s1 + $0x48] sm:$0xff]
      %v287 = vld [vmem:[%s1 + $0x50] sm:$0xff]
      %v288 = vld [vmem:[%s1 + $0x58] sm:$0xff]
      %v289 = vld [vmem:[%s1 + $0x60] sm:$0xff]
      %v290 = vld [vmem:[%s1 + $0x68] sm:$0xff]
      %v291 = vld [vmem:[%s1 + $0x70] sm:$0xff]
      %v292 = vld [vmem:[%s1 + $0x78] sm:$0xff]
      %v293 = vld [vmem:[%s1 + $0x80] sm:$0xff]
      %v294 = vld [vmem:[%s1 + $0x88] sm:$0xff]
      %v295 = vld [vmem:[%s1 + $0x90] sm:$0xff]
      %v296 = vld [vmem:[%s1 + $0x98] sm:$0xff]
      %v297 = vld [vmem:[%s1 + $0xa0] sm:$0xff]
      %v298 = vld [vmem:[%s1 + $0xa8] sm:$0xff]
      %v299 = vld [vmem:[%s1 + $0xb0] sm:$0xff]
      %v300 = vld [vmem:[%s1 + $0xb8] sm:$0xff]
      %v301 = vld [vmem:[%s1 + $0xc0] sm:$0xff]
      %v302 = vld [vmem:[%s1 + $0xc8] sm:$0xff]
      %v303 = vld [vmem:[%s1 + $0xd0] sm:$0xff]
      %v304 = vld [vmem:[%s1 + $0xd8] sm:$0xff]
      %v305 = vld [vmem:[%s1 + $0xe0] sm:$0xff]
      %v306 = vld [vmem:[%s1 + $0xe8] sm:$0xff]
      %v307 = vld [vmem:[%s1 + $0xf0] sm:$0xff]
      %v308 = vld [vmem:[%s1 + $0xf8] sm:$0xff]
      %v309 = vld [vmem:[%s1 + $0x100] sm:$0xff]
      %v310 = vld [vmem:[%s1 + $0x108] sm:$0xff]
      %v311 = vld [vmem:[%s1 + $0x110] sm:$0xff]
      %v312 = vld [vmem:[%s1 + $0x118] sm:$0xff]
      %v313 = vld [vmem:[%s1 + $0x120] sm:$0xff]
      %v314 = vld [vmem:[%s1 + $0x128] sm:$0xff]
      %v315 = vld [vmem:[%s1 + $0x130] sm:$0xff]
      %v316 = vld [vmem:[%s1 + $0x138] sm:$0xff]
      %v317 = vld [vmem:[%s1 + $0x140] sm:$0xff]
      %v318 = vld [vmem:[%s1 + $0x148] sm:$0xff]
      %v319 = vld [vmem:[%s1 + $0x150] sm:$0xff]
      %v320 = vld [vmem:[%s1 + $0x158] sm:$0xff]
      %v321 = vld [vmem:[%s1 + $0x160] sm:$0xff]
      %v322 = vld [vmem:[%s1 + $0x168] sm:$0xff]
      %v323 = vld [vmem:[%s1 + $0x170] sm:$0xff]
      %v324 = vld [vmem:[%s1 + $0x178] sm:$0xff]
      %v325 = vld [vmem:[%s1 + $0x180] sm:$0xff]
      %v326 = vld [vmem:[%s1 + $0x188] sm:$0xff]
      %s327 = scalar_lea.vmem %s1, 400
      %v328 = vld [vmem:[%s327] sm:$0xff]
      %v329 = vld [vmem:[%s327 + $0x8] sm:$0xff]
      %v330 = vld [vmem:[%s327 + $0x10] sm:$0xff]
      %v331 = vld [vmem:[%s327 + $0x18] sm:$0xff]
      %v332 = vld [vmem:[%s327 + $0x20] sm:$0xff]
      %v333 = vld [vmem:[%s327 + $0x28] sm:$0xff]
      %v334 = vld [vmem:[%s327 + $0x30] sm:$0xff]
      %v335 = vld [vmem:[%s327 + $0x38] sm:$0xff]
      %v336 = vld [vmem:[%s327 + $0x40] sm:$0xff]
      %v337 = vld [vmem:[%s327 + $0x48] sm:$0xff]
      %v338 = vld [vmem:[%s327 + $0x50] sm:$0xff]
      %v339 = vld [vmem:[%s327 + $0x58] sm:$0xff]
      %v340 = vld [vmem:[%s327 + $0x60] sm:$0xff]
      %v341 = vld [vmem:[%s327 + $0x68] sm:$0xff]
      %v342 = vld [vmem:[%s327 + $0x70] sm:$0xff]
      %v343 = vld [vmem:[%s327 + $0x78] sm:$0xff]
      %v344 = vld [vmem:[%s327 + $0x80] sm:$0xff]
      %v345 = vld [vmem:[%s327 + $0x88] sm:$0xff]
      %v346 = vld [vmem:[%s327 + $0x90] sm:$0xff]
      %v347 = vld [vmem:[%s327 + $0x98] sm:$0xff]
      %v348 = vld [vmem:[%s327 + $0xa0] sm:$0xff]
      %v349 = vld [vmem:[%s327 + $0xa8] sm:$0xff]
      %v350 = vld [vmem:[%s327 + $0xb0] sm:$0xff]
      %v351 = vld [vmem:[%s327 + $0xb8] sm:$0xff]
      %v352 = vld [vmem:[%s327 + $0xc0] sm:$0xff]
      %v353 = vld [vmem:[%s327 + $0xc8] sm:$0xff]
      %v354 = vld [vmem:[%s327 + $0xd0] sm:$0xff]
      %v355 = vld [vmem:[%s327 + $0xd8] sm:$0xff]
      %v356 = vld [vmem:[%s327 + $0xe0] sm:$0xff]
      %v357 = vld [vmem:[%s327 + $0xe8] sm:$0xff]
      %v358 = vld [vmem:[%s327 + $0xf0] sm:$0xff]
      %v359 = vld [vmem:[%s327 + $0xf8] sm:$0xff]
      %v360 = vld [vmem:[%s327 + $0x100] sm:$0xff]
      %v361 = vld [vmem:[%s327 + $0x108] sm:$0xff]
      %v362 = vld [vmem:[%s327 + $0x110] sm:$0xff]
      %v363 = vld [vmem:[%s327 + $0x118] sm:$0xff]
      %v364 = vld [vmem:[%s327 + $0x120] sm:$0xff]
      %v365 = vld [vmem:[%s327 + $0x128] sm:$0xff]
      %v366 = vld [vmem:[%s327 + $0x130] sm:$0xff]
      %v367 = vld [vmem:[%s327 + $0x138] sm:$0xff]
      %v368 = vld [vmem:[%s327 + $0x140] sm:$0xff]
      %v369 = vld [vmem:[%s327 + $0x148] sm:$0xff]
      %v370 = vld [vmem:[%s327 + $0x150] sm:$0xff]
      %v371 = vld [vmem:[%s327 + $0x158] sm:$0xff]
      %v372 = vld [vmem:[%s327 + $0x160] sm:$0xff]
      %v373 = vld [vmem:[%s327 + $0x168] sm:$0xff]
      %v374 = vld [vmem:[%s327 + $0x170] sm:$0xff]
      %v375 = vld [vmem:[%s327 + $0x178] sm:$0xff]
      %v376 = vld [vmem:[%s327 + $0x180] sm:$0xff]
      %v377 = vld [vmem:[%s327 + $0x188] sm:$0xff]
      %s378 = scalar_lea.vmem %s1, 800
      %v379 = vld [vmem:[%s378] sm:$0xff]
      %v380 = vld [vmem:[%s378 + $0x8] sm:$0xff]
      %v381 = vld [vmem:[%s378 + $0x10] sm:$0xff]
      %v382 = vld [vmem:[%s378 + $0x18] sm:$0xff]
      %v383 = vld [vmem:[%s378 + $0x20] sm:$0xff]
      %v384 = vld [vmem:[%s378 + $0x28] sm:$0xff]
      %v385 = vld [vmem:[%s378 + $0x30] sm:$0xff]
      %v386 = vld [vmem:[%s378 + $0x38] sm:$0xff]
      %v387 = vld [vmem:[%s378 + $0x40] sm:$0xff]
      %v388 = vld [vmem:[%s378 + $0x48] sm:$0xff]
      %v389 = vld [vmem:[%s378 + $0x50] sm:$0xff]
      %v390 = vld [vmem:[%s378 + $0x58] sm:$0xff]
      %v391 = vld [vmem:[%s378 + $0x60] sm:$0xff]
      %v392 = vld [vmem:[%s378 + $0x68] sm:$0xff]
      %v393 = vld [vmem:[%s378 + $0x70] sm:$0xff]
      %v394 = vld [vmem:[%s378 + $0x78] sm:$0xff]
      %v395 = vld [vmem:[%s378 + $0x80] sm:$0xff]
      %v396 = vld [vmem:[%s378 + $0x88] sm:$0xff]
      %v397 = vld [vmem:[%s378 + $0x90] sm:$0xff]
      %v398 = vld [vmem:[%s378 + $0x98] sm:$0xff]
      %v399 = vld [vmem:[%s378 + $0xa0] sm:$0xff]
      %v400 = vld [vmem:[%s378 + $0xa8] sm:$0xff]
      %v401 = vld [vmem:[%s378 + $0xb0] sm:$0xff]
      %v402 = vld [vmem:[%s378 + $0xb8] sm:$0xff]
      %v403 = vld [vmem:[%s378 + $0xc0] sm:$0xff]
      %v404 = vld [vmem:[%s378 + $0xc8] sm:$0xff]
      %v405 = vld [vmem:[%s378 + $0xd0] sm:$0xff]
      %v406 = vld [vmem:[%s378 + $0xd8] sm:$0xff]
      %v407 = vld [vmem:[%s378 + $0xe0] sm:$0xff]
      %v408 = vld [vmem:[%s378 + $0xe8] sm:$0xff]
      %v409 = vld [vmem:[%s378 + $0xf0] sm:$0xff]
      %v410 = vld [vmem:[%s378 + $0xf8] sm:$0xff]
      %v411 = vld [vmem:[%s378 + $0x100] sm:$0xff]
      %v412 = vld [vmem:[%s378 + $0x108] sm:$0xff]
      %v413 = vld [vmem:[%s378 + $0x110] sm:$0xff]
      %v414 = vld [vmem:[%s378 + $0x118] sm:$0xff]
      %v415 = vld [vmem:[%s378 + $0x120] sm:$0xff]
      %v416 = vld [vmem:[%s378 + $0x128] sm:$0xff]
      %v417 = vld [vmem:[%s378 + $0x130] sm:$0xff]
      %v418 = vld [vmem:[%s378 + $0x138] sm:$0xff]
      %v419 = vld [vmem:[%s378 + $0x140] sm:$0xff]
      %v420 = vld [vmem:[%s378 + $0x148] sm:$0xff]
      %v421 = vld [vmem:[%s378 + $0x150] sm:$0xff]
      %v422 = vld [vmem:[%s378 + $0x158] sm:$0xff]
      %v423 = vld [vmem:[%s378 + $0x160] sm:$0xff]
      %v424 = vld [vmem:[%s378 + $0x168] sm:$0xff]
      %v425 = vld [vmem:[%s378 + $0x170] sm:$0xff]
      %v426 = vld [vmem:[%s378 + $0x178] sm:$0xff]
      %v427 = vld [vmem:[%s378 + $0x180] sm:$0xff]
      %v428 = vld [vmem:[%s378 + $0x188] sm:$0xff]
      %v429 = vld [vmem:[%s2] sm:$0xff]
      %v430 = vld [vmem:[%s2 + $0x8] sm:$0xff]
      %v431 = vld [vmem:[%s2 + $0x10] sm:$0xff]
      %v432 = vld [vmem:[%s2 + $0x18] sm:$0xff]
      %s433 = scalar_lea.vmem %s2, 32
      %v434 = vld [vmem:[%s433] sm:$0xff]
      %v435 = vld [vmem:[%s433 + $0x8] sm:$0xff]
      %v436 = vld [vmem:[%s433 + $0x10] sm:$0xff]
      %v437 = vld [vmem:[%s433 + $0x18] sm:$0xff]
      %s438 = scalar_lea.vmem %s2, 64
      %v439 = vld [vmem:[%s438] sm:$0xff]
      %v440 = vld [vmem:[%s438 + $0x8] sm:$0xff]
      %v441 = vld [vmem:[%s438 + $0x10] sm:$0xff]
      %v442 = vld [vmem:[%s438 + $0x18] sm:$0xff]
      %v443 = vld [vmem:[%s3] sm:$0xff]
      %v444 = vld [vmem:[%s3 + $0x8] sm:$0xff]
      %v445 = vld [vmem:[%s3 + $0x10] sm:$0xff]
      %v446 = vld [vmem:[%s3 + $0x18] sm:$0xff]
      %v447 = vld [vmem:[%s261] sm:$0xff]
      %v449 = vcombine.high %v447, %v447
      %vm450 = vcmask 588800
      %v451 = vsel %vm450, %v449, 0
      %453 = vmatprep.subr.mxu0 %v278
      %454 = vmatpush1.msra.mxu0 %v277
      %455 = vmatprep.subr.mxu0 %v280
      %456 = vmatpush1.msra.mxu0 %v279
      %457 = vmatprep.subr.mxu0 %v282
      %458 = vmatpush1.msra.mxu0 %v281
      %459 = vmatprep.subr.mxu0 %v284
      %460 = vmatpush1.msra.mxu0 %v283
      %461 = vmatprep.subr.mxu0 %v286
      %462 = vmatpush1.msra.mxu0 %v285
      %463 = vmatprep.subr.mxu0 %v288
      %464 = vmatpush1.msra.mxu0 %v287
      %465 = vmatprep.subr.mxu0 %v290
      %466 = vmatpush1.msra.mxu0 %v289
      %467 = vmatprep.subr.mxu0 %v292
      %468 = vmatpush1.msra.mxu0 %v291
      %469 = vmatprep.subr.mxu0 %v294
      %470 = vmatpush1.msra.mxu0 %v293
      %471 = vmatprep.subr.mxu0 %v296
      %472 = vmatpush1.msra.mxu0 %v295
      %473 = vmatprep.subr.mxu0 %v298
      %474 = vmatpush1.msra.mxu0 %v297
      %475 = vmatprep.subr.mxu0 %v300
      %476 = vmatpush1.msra.mxu0 %v299
      %477 = vmatprep.subr.mxu0 %v302
      %478 = vmatpush1.msra.mxu0 %v301
      %479 = vmatprep.subr.mxu0 %v304
      %480 = vmatpush1.msra.mxu0 %v303
      %481 = vmatprep.subr.mxu0 %v306
      %482 = vmatpush1.msra.mxu0 %v305
      %483 = vmatprep.subr.mxu0 %v308
      %484 = vmatpush1.msra.mxu0 %v307
      %485 = vmatprep.subr.mxu0 %v310
      %486 = vmatpush1.msra.mxu0 %v309
      %487 = vmatprep.subr.mxu0 %v312
      %488 = vmatpush1.msra.mxu0 %v311
      %489 = vmatprep.subr.mxu0 %v314
      %490 = vmatpush1.msra.mxu0 %v313
      %491 = vmatprep.subr.mxu0 %v316
      %492 = vmatpush1.msra.mxu0 %v315
      %493 = vmatprep.subr.mxu0 %v318
      %494 = vmatpush1.msra.mxu0 %v317
      %495 = vmatprep.subr.mxu0 %v320
      %496 = vmatpush1.msra.mxu0 %v319
      %497 = vmatprep.subr.mxu0 %v322
      %498 = vmatpush1.msra.mxu0 %v321
      %499 = vmatprep.subr.mxu0 %v324
      %500 = vmatpush1.msra.mxu0 %v323
      %501 = vmatprep.subr.mxu0 %v326
      %502 = vmatpush1.msra.mxu0 %v325
      %503 = vmatprep.subr.mxu0 0.0
      %504 = vmatpush1.msra.mxu0 0.0
      %505 = vmatprep.subr.mxu0 0.0
      %506 = vmatpush1.msra.mxu0 0.0
      %507 = vmatprep.subr.mxu0 0.0
      %508 = vmatpush1.msra.mxu0 0.0
      %509 = vmatprep.subr.mxu0 0.0
      %510 = vmatpush1.msra.mxu0 0.0
      %511 = vmatprep.subr.mxu0 0.0
      %512 = vmatpush1.msra.mxu0 0.0
      %513 = vmatprep.subr.mxu0 0.0
      %514 = vmatpush1.msra.mxu0 0.0
      %515 = vmatprep.subr.mxu0 0.0
      %516 = vmatpush1.msra.mxu0 0.0
      %517 = vmatprep.mubr.f32.mxu0 %v451
      %518 = vmatmul.mubr.f32.gmra.mrb[0].mxu0 %v447
      %v519 = vpop.f32.mrb[0].mxu0
      %v520 = vadd.f32 0.0, %v519
      %v521 = vpop.f32.mrb[0].mxu0
      %v522 = vadd.f32 0.0, %v521
      %523 = vdwg.mxu0
      %524 = vmatprep.subr.mxu0 %v329
      %525 = vmatpush1.msra.mxu0 %v328
      %526 = vmatprep.subr.mxu0 %v331
      %527 = vmatpush1.msra.mxu0 %v330
      %528 = vmatprep.subr.mxu0 %v333
      %529 = vmatpush1.msra.mxu0 %v332
      %530 = vmatprep.subr.mxu0 %v335
      %531 = vmatpush1.msra.mxu0 %v334
      %532 = vmatprep.subr.mxu0 %v337
      %533 = vmatpush1.msra.mxu0 %v336
      %534 = vmatprep.subr.mxu0 %v339
      %535 = vmatpush1.msra.mxu0 %v338
      %536 = vmatprep.subr.mxu0 %v341
      %537 = vmatpush1.msra.mxu0 %v340
      %538 = vmatprep.subr.mxu0 %v343
      %539 = vmatpush1.msra.mxu0 %v342
      %540 = vmatprep.subr.mxu0 %v345
      %541 = vmatpush1.msra.mxu0 %v344
      %542 = vmatprep.subr.mxu0 %v347
      %543 = vmatpush1.msra.mxu0 %v346
      %544 = vmatprep.subr.mxu0 %v349
      %545 = vmatpush1.msra.mxu0 %v348
      %546 = vmatprep.subr.mxu0 %v351
      %547 = vmatpush1.msra.mxu0 %v350
      %548 = vmatprep.subr.mxu0 %v353
      %549 = vmatpush1.msra.mxu0 %v352
      %550 = vmatprep.subr.mxu0 %v355
      %551 = vmatpush1.msra.mxu0 %v354
      %552 = vmatprep.subr.mxu0 %v357
      %553 = vmatpush1.msra.mxu0 %v356
      %554 = vmatprep.subr.mxu0 %v359
      %555 = vmatpush1.msra.mxu0 %v358
      %556 = vmatprep.subr.mxu0 %v361
      %557 = vmatpush1.msra.mxu0 %v360
      %558 = vmatprep.subr.mxu0 %v363
      %559 = vmatpush1.msra.mxu0 %v362
      %560 = vmatprep.subr.mxu0 %v365
      %561 = vmatpush1.msra.mxu0 %v364
      %562 = vmatprep.subr.mxu0 %v367
      %563 = vmatpush1.msra.mxu0 %v366
      %564 = vmatprep.subr.mxu0 %v369
      %565 = vmatpush1.msra.mxu0 %v368
      %566 = vmatprep.subr.mxu0 %v371
      %567 = vmatpush1.msra.mxu0 %v370
      %568 = vmatprep.subr.mxu0 %v373
      %569 = vmatpush1.msra.mxu0 %v372
      %570 = vmatprep.subr.mxu0 %v375
      %571 = vmatpush1.msra.mxu0 %v374
      %572 = vmatprep.subr.mxu0 %v377
      %573 = vmatpush1.msra.mxu0 %v376
      %574 = vmatprep.subr.mxu0 0.0
      %575 = vmatpush1.msra.mxu0 0.0
      %576 = vmatprep.subr.mxu0 0.0
      %577 = vmatpush1.msra.mxu0 0.0
      %578 = vmatprep.subr.mxu0 0.0
      %579 = vmatpush1.msra.mxu0 0.0
      %580 = vmatprep.subr.mxu0 0.0
      %581 = vmatpush1.msra.mxu0 0.0
      %582 = vmatprep.subr.mxu0 0.0
      %583 = vmatpush1.msra.mxu0 0.0
      %584 = vmatprep.subr.mxu0 0.0
      %585 = vmatpush1.msra.mxu0 0.0
      %586 = vmatprep.subr.mxu0 0.0
      %587 = vmatpush1.msra.mxu0 0.0
      %588 = vmatprep.mubr.f32.mxu0 %v451
      %589 = vmatmul.mubr.f32.gmra.mrb[0].mxu0 %v447
      %v590 = vpop.f32.mrb[0].mxu0
      %v591 = vadd.f32 0.0, %v590
      %v592 = vpop.f32.mrb[0].mxu0
      %v593 = vadd.f32 0.0, %v592
      %594 = vdwg.mxu0
      %vm595 = vcmask 31744
      %v597 = vsel %vm595, %v434, 0
      %v600 = vsel %vm595, %v435, 0
      %v603 = vsel %vm595, %v436, 0
      %v606 = vsel %vm595, %v437, 0
      %vm608 = vcmask 1043456
      %v610 = vsel %vm608, %v591, 0
      %v613 = vsel %vm608, %v593, 0
      %615 = vmatprep.subr.mxu0 %v613
      %616 = vmatpush1.msra.mxu0 %v610
      %617 = vmatprep.subr.mxu0 0.0
      %618 = vmatpush1.msra.mxu0 0.0
      %619 = vmatprep.subr.mxu0 0.0
      %620 = vmatpush1.msra.mxu0 0.0
      %621 = vmatprep.subr.mxu0 0.0
      %622 = vmatpush1.msra.mxu0 0.0
      %623 = vmatprep.subr.mxu0 0.0
      %624 = vmatpush1.msra.mxu0 0.0
      %625 = vmatprep.subr.mxu0 0.0
      %626 = vmatpush1.msra.mxu0 0.0
      %627 = vmatprep.subr.mxu0 0.0
      %628 = vmatpush1.msra.mxu0 0.0
      %629 = vmatprep.subr.mxu0 0.0
      %630 = vmatpush1.msra.mxu0 0.0
      %631 = vmatprep.subr.mxu0 0.0
      %632 = vmatpush1.msra.mxu0 0.0
      %633 = vmatprep.subr.mxu0 0.0
      %634 = vmatpush1.msra.mxu0 0.0
      %635 = vmatprep.subr.mxu0 0.0
      %636 = vmatpush1.msra.mxu0 0.0
      %637 = vmatprep.subr.mxu0 0.0
      %638 = vmatpush1.msra.mxu0 0.0
      %639 = vmatprep.subr.mxu0 0.0
      %640 = vmatpush1.msra.mxu0 0.0
      %641 = vmatprep.subr.mxu0 0.0
      %642 = vmatpush1.msra.mxu0 0.0
      %643 = vmatprep.subr.mxu0 0.0
      %644 = vmatpush1.msra.mxu0 0.0
      %645 = vmatprep.subr.mxu0 0.0
      %646 = vmatpush1.msra.mxu0 0.0
      %647 = vmatprep.subr.mxu0 0.0
      %648 = vmatpush1.msra.mxu0 0.0
      %649 = vmatprep.subr.mxu0 0.0
      %650 = vmatpush1.msra.mxu0 0.0
      %651 = vmatprep.subr.mxu0 0.0
      %652 = vmatpush1.msra.mxu0 0.0
      %653 = vmatprep.subr.mxu0 0.0
      %654 = vmatpush1.msra.mxu0 0.0
      %655 = vmatprep.subr.mxu0 0.0
      %656 = vmatpush1.msra.mxu0 0.0
      %657 = vmatprep.subr.mxu0 0.0
      %658 = vmatpush1.msra.mxu0 0.0
      %659 = vmatprep.subr.mxu0 0.0
      %660 = vmatpush1.msra.mxu0 0.0
      %661 = vmatprep.subr.mxu0 0.0
      %662 = vmatpush1.msra.mxu0 0.0
      %663 = vmatprep.subr.mxu0 0.0
      %664 = vmatpush1.msra.mxu0 0.0
      %665 = vmatprep.subr.mxu0 0.0
      %666 = vmatpush1.msra.mxu0 0.0
      %667 = vmatprep.subr.mxu0 0.0
      %668 = vmatpush1.msra.mxu0 0.0
      %669 = vmatprep.subr.mxu0 0.0
      %670 = vmatpush1.msra.mxu0 0.0
      %671 = vmatprep.subr.mxu0 0.0
      %672 = vmatpush1.msra.mxu0 0.0
      %673 = vmatprep.subr.mxu0 0.0
      %674 = vmatpush1.msra.mxu0 0.0
      %675 = vmatprep.subr.mxu0 0.0
      %676 = vmatpush1.msra.mxu0 0.0
      %677 = vmatprep.subr.mxu0 0.0
      %678 = vmatpush1.msra.mxu0 0.0
      %679 = vmatprep.mubr.f32.mxu0 0.0
      %680 = vmatmul.mubr.f32.gmra.mrb[0].mxu0 %v597
      %v681 = vpop.f32.mrb[0].mxu0
      %v682 = vadd.f32 0.0, %v681
      %v683 = vpop.f32.mrb[0].mxu0
      %v684 = vadd.f32 0.0, %v683
      %685 = vmatprep.mubr.f32.mxu0 0.0
      %686 = vmatmul.mubr.f32.gmra.mrb[0].mxu0 %v600
      %v687 = vpop.f32.mrb[0].mxu0
      %v688 = vadd.f32 0.0, %v687
      %v689 = vpop.f32.mrb[0].mxu0
      %v690 = vadd.f32 0.0, %v689
      %691 = vmatprep.mubr.f32.mxu0 0.0
      %692 = vmatmul.mubr.f32.gmra.mrb[0].mxu0 %v603
      %v693 = vpop.f32.mrb[0].mxu0
      %v694 = vadd.f32 0.0, %v693
      %v695 = vpop.f32.mrb[0].mxu0
      %v696 = vadd.f32 0.0, %v695
      %697 = vmatprep.mubr.f32.mxu0 0.0
      %698 = vmatmul.mubr.f32.gmra.mrb[0].mxu0 %v606
      %v699 = vpop.f32.mrb[0].mxu0
      %v700 = vadd.f32 0.0, %v699
      %v701 = vpop.f32.mrb[0].mxu0
      %v702 = vadd.f32 0.0, %v701
      %703 = vdwg.mxu0
      %v705 = vsel %vm595, %v429, 0
      %v708 = vsel %vm595, %v430, 0
      %v711 = vsel %vm595, %v431, 0
      %v714 = vsel %vm595, %v432, 0
      %v717 = vsel %vm608, %v520, 0
      %v720 = vsel %vm608, %v522, 0
      %722 = vmatprep.subr.mxu0 %v720
      %723 = vmatpush1.msra.mxu0 %v717
      %724 = vmatprep.subr.mxu0 0.0
      %725 = vmatpush1.msra.mxu0 0.0
      %726 = vmatprep.subr.mxu0 0.0
      %727 = vmatpush1.msra.mxu0 0.0
      %728 = vmatprep.subr.mxu0 0.0
      %729 = vmatpush1.msra.mxu0 0.0
      %730 = vmatprep.subr.mxu0 0.0
      %731 = vmatpush1.msra.mxu0 0.0
      %732 = vmatprep.subr.mxu0 0.0
      %733 = vmatpush1.msra.mxu0 0.0
      %734 = vmatprep.subr.mxu0 0.0
      %735 = vmatpush1.msra.mxu0 0.0
      %736 = vmatprep.subr.mxu0 0.0
      %737 = vmatpush1.msra.mxu0 0.0
      %738 = vmatprep.subr.mxu0 0.0
      %739 = vmatpush1.msra.mxu0 0.0
      %740 = vmatprep.subr.mxu0 0.0
      %741 = vmatpush1.msra.mxu0 0.0
      %742 = vmatprep.subr.mxu0 0.0
      %743 = vmatpush1.msra.mxu0 0.0
      %744 = vmatprep.subr.mxu0 0.0
      %745 = vmatpush1.msra.mxu0 0.0
      %746 = vmatprep.subr.mxu0 0.0
      %747 = vmatpush1.msra.mxu0 0.0
      %748 = vmatprep.subr.mxu0 0.0
      %749 = vmatpush1.msra.mxu0 0.0
      %750 = vmatprep.subr.mxu0 0.0
      %751 = vmatpush1.msra.mxu0 0.0
      %752 = vmatprep.subr.mxu0 0.0
      %753 = vmatpush1.msra.mxu0 0.0
      %754 = vmatprep.subr.mxu0 0.0
      %755 = vmatpush1.msra.mxu0 0.0
      %756 = vmatprep.subr.mxu0 0.0
      %757 = vmatpush1.msra.mxu0 0.0
      %758 = vmatprep.subr.mxu0 0.0
      %759 = vmatpush1.msra.mxu0 0.0
      %760 = vmatprep.subr.mxu0 0.0
      %761 = vmatpush1.msra.mxu0 0.0
      %762 = vmatprep.subr.mxu0 0.0
      %763 = vmatpush1.msra.mxu0 0.0
      %764 = vmatprep.subr.mxu0 0.0
      %765 = vmatpush1.msra.mxu0 0.0
      %766 = vmatprep.subr.mxu0 0.0
      %767 = vmatpush1.msra.mxu0 0.0
      %768 = vmatprep.subr.mxu0 0.0
      %769 = vmatpush1.msra.mxu0 0.0
      %770 = vmatprep.subr.mxu0 0.0
      %771 = vmatpush1.msra.mxu0 0.0
      %772 = vmatprep.subr.mxu0 0.0
      %773 = vmatpush1.msra.mxu0 0.0
      %774 = vmatprep.subr.mxu0 0.0
      %775 = vmatpush1.msra.mxu0 0.0
      %776 = vmatprep.subr.mxu0 0.0
      %777 = vmatpush1.msra.mxu0 0.0
      %778 = vmatprep.subr.mxu0 0.0
      %779 = vmatpush1.msra.mxu0 0.0
      %780 = vmatprep.subr.mxu0 0.0
      %781 = vmatpush1.msra.mxu0 0.0
      %782 = vmatprep.subr.mxu0 0.0
      %783 = vmatpush1.msra.mxu0 0.0
      %784 = vmatprep.subr.mxu0 0.0
      %785 = vmatpush1.msra.mxu0 0.0
      %786 = vmatprep.mubr.f32.mxu0 0.0
      %787 = vmatmul.mubr.f32.gmra.mrb[0].mxu0 %v705
      %v788 = vpop.f32.mrb[0].mxu0
      %v789 = vadd.f32 %v682, %v788
      %v790 = vpop.f32.mrb[0].mxu0
      %v791 = vadd.f32 %v684, %v790
      %792 = vmatprep.mubr.f32.mxu0 0.0
      %793 = vmatmul.mubr.f32.gmra.mrb[0].mxu0 %v708
      %v794 = vpop.f32.mrb[0].mxu0
      %v795 = vadd.f32 %v688, %v794
      %v796 = vpop.f32.mrb[0].mxu0
      %v797 = vadd.f32 %v690, %v796
      %798 = vmatprep.mubr.f32.mxu0 0.0
      %799 = vmatmul.mubr.f32.gmra.mrb[0].mxu0 %v711
      %v800 = vpop.f32.mrb[0].mxu0
      %v801 = vadd.f32 %v694, %v800
      %v802 = vpop.f32.mrb[0].mxu0
      %v803 = vadd.f32 %v696, %v802
      %804 = vmatprep.mubr.f32.mxu0 0.0
      %805 = vmatmul.mubr.f32.gmra.mrb[0].mxu0 %v714
      %v806 = vpop.f32.mrb[0].mxu0
      %v807 = vadd.f32 %v700, %v806
      %v808 = vpop.f32.mrb[0].mxu0
      %v809 = vadd.f32 %v702, %v808
      %810 = vdwg.mxu0
      %811 = vmatprep.subr.mxu0 %v380
      %812 = vmatpush1.msra.mxu0 %v379
      %813 = vmatprep.subr.mxu0 %v382
      %814 = vmatpush1.msra.mxu0 %v381
      %815 = vmatprep.subr.mxu0 %v384
      %816 = vmatpush1.msra.mxu0 %v383
      %817 = vmatprep.subr.mxu0 %v386
      %818 = vmatpush1.msra.mxu0 %v385
      %819 = vmatprep.subr.mxu0 %v388
      %820 = vmatpush1.msra.mxu0 %v387
      %821 = vmatprep.subr.mxu0 %v390
      %822 = vmatpush1.msra.mxu0 %v389
      %823 = vmatprep.subr.mxu0 %v392
      %824 = vmatpush1.msra.mxu0 %v391
      %825 = vmatprep.subr.mxu0 %v394
      %826 = vmatpush1.msra.mxu0 %v393
      %827 = vmatprep.subr.mxu0 %v396
      %828 = vmatpush1.msra.mxu0 %v395
      %829 = vmatprep.subr.mxu0 %v398
      %830 = vmatpush1.msra.mxu0 %v397
      %831 = vmatprep.subr.mxu0 %v400
      %832 = vmatpush1.msra.mxu0 %v399
      %833 = vmatprep.subr.mxu0 %v402
      %834 = vmatpush1.msra.mxu0 %v401
      %835 = vmatprep.subr.mxu0 %v404
      %836 = vmatpush1.msra.mxu0 %v403
      %837 = vmatprep.subr.mxu0 %v406
      %838 = vmatpush1.msra.mxu0 %v405
      %839 = vmatprep.subr.mxu0 %v408
      %840 = vmatpush1.msra.mxu0 %v407
      %841 = vmatprep.subr.mxu0 %v410
      %842 = vmatpush1.msra.mxu0 %v409
      %843 = vmatprep.subr.mxu0 %v412
      %844 = vmatpush1.msra.mxu0 %v411
      %845 = vmatprep.subr.mxu0 %v414
      %846 = vmatpush1.msra.mxu0 %v413
      %847 = vmatprep.subr.mxu0 %v416
      %848 = vmatpush1.msra.mxu0 %v415
      %849 = vmatprep.subr.mxu0 %v418
      %850 = vmatpush1.msra.mxu0 %v417
      %851 = vmatprep.subr.mxu0 %v420
      %852 = vmatpush1.msra.mxu0 %v419
      %853 = vmatprep.subr.mxu0 %v422
      %854 = vmatpush1.msra.mxu0 %v421
      %855 = vmatprep.subr.mxu0 %v424
      %856 = vmatpush1.msra.mxu0 %v423
      %857 = vmatprep.subr.mxu0 %v426
      %858 = vmatpush1.msra.mxu0 %v425
      %859 = vmatprep.subr.mxu0 %v428
      %860 = vmatpush1.msra.mxu0 %v427
      %861 = vmatprep.subr.mxu0 0.0
      %862 = vmatpush1.msra.mxu0 0.0
      %863 = vmatprep.subr.mxu0 0.0
      %864 = vmatpush1.msra.mxu0 0.0
      %865 = vmatprep.subr.mxu0 0.0
      %866 = vmatpush1.msra.mxu0 0.0
      %867 = vmatprep.subr.mxu0 0.0
      %868 = vmatpush1.msra.mxu0 0.0
      %869 = vmatprep.subr.mxu0 0.0
      %870 = vmatpush1.msra.mxu0 0.0
      %871 = vmatprep.subr.mxu0 0.0
      %872 = vmatpush1.msra.mxu0 0.0
      %873 = vmatprep.subr.mxu0 0.0
      %874 = vmatpush1.msra.mxu0 0.0
      %875 = vmatprep.mubr.f32.mxu0 %v451
      %876 = vmatmul.mubr.f32.gmra.mrb[0].mxu0 %v447
      %v877 = vpop.f32.mrb[0].mxu0
      %v878 = vadd.f32 0.0, %v877
      %v879 = vpop.f32.mrb[0].mxu0
      %v880 = vadd.f32 0.0, %v879
      %881 = vdwg.mxu0
      %v883 = vsel %vm595, %v439, 0
      %v886 = vsel %vm595, %v440, 0
      %v889 = vsel %vm595, %v441, 0
      %v892 = vsel %vm595, %v442, 0
      %v895 = vsel %vm608, %v878, 0
      %v898 = vsel %vm608, %v880, 0
      %900 = vmatprep.subr.mxu0 %v898
      %901 = vmatpush1.msra.mxu0 %v895
      %902 = vmatprep.subr.mxu0 0.0
      %903 = vmatpush1.msra.mxu0 0.0
      %904 = vmatprep.subr.mxu0 0.0
      %905 = vmatpush1.msra.mxu0 0.0
      %906 = vmatprep.subr.mxu0 0.0
      %907 = vmatpush1.msra.mxu0 0.0
      %908 = vmatprep.subr.mxu0 0.0
      %909 = vmatpush1.msra.mxu0 0.0
      %910 = vmatprep.subr.mxu0 0.0
      %911 = vmatpush1.msra.mxu0 0.0
      %912 = vmatprep.subr.mxu0 0.0
      %913 = vmatpush1.msra.mxu0 0.0
      %914 = vmatprep.subr.mxu0 0.0
      %915 = vmatpush1.msra.mxu0 0.0
      %916 = vmatprep.subr.mxu0 0.0
      %917 = vmatpush1.msra.mxu0 0.0
      %918 = vmatprep.subr.mxu0 0.0
      %919 = vmatpush1.msra.mxu0 0.0
      %920 = vmatprep.subr.mxu0 0.0
      %921 = vmatpush1.msra.mxu0 0.0
      %922 = vmatprep.subr.mxu0 0.0
      %923 = vmatpush1.msra.mxu0 0.0
      %924 = vmatprep.subr.mxu0 0.0
      %925 = vmatpush1.msra.mxu0 0.0
      %926 = vmatprep.subr.mxu0 0.0
      %927 = vmatpush1.msra.mxu0 0.0
      %928 = vmatprep.subr.mxu0 0.0
      %929 = vmatpush1.msra.mxu0 0.0
      %930 = vmatprep.subr.mxu0 0.0
      %931 = vmatpush1.msra.mxu0 0.0
      %932 = vmatprep.subr.mxu0 0.0
      %933 = vmatpush1.msra.mxu0 0.0
      %934 = vmatprep.subr.mxu0 0.0
      %935 = vmatpush1.msra.mxu0 0.0
      %936 = vmatprep.subr.mxu0 0.0
      %937 = vmatpush1.msra.mxu0 0.0
      %938 = vmatprep.subr.mxu0 0.0
      %939 = vmatpush1.msra.mxu0 0.0
      %940 = vmatprep.subr.mxu0 0.0
      %941 = vmatpush1.msra.mxu0 0.0
      %942 = vmatprep.subr.mxu0 0.0
      %943 = vmatpush1.msra.mxu0 0.0
      %944 = vmatprep.subr.mxu0 0.0
      %945 = vmatpush1.msra.mxu0 0.0
      %946 = vmatprep.subr.mxu0 0.0
      %947 = vmatpush1.msra.mxu0 0.0
      %948 = vmatprep.subr.mxu0 0.0
      %949 = vmatpush1.msra.mxu0 0.0
      %950 = vmatprep.subr.mxu0 0.0
      %951 = vmatpush1.msra.mxu0 0.0
      %952 = vmatprep.subr.mxu0 0.0
      %953 = vmatpush1.msra.mxu0 0.0
      %954 = vmatprep.subr.mxu0 0.0
      %955 = vmatpush1.msra.mxu0 0.0
      %956 = vmatprep.subr.mxu0 0.0
      %957 = vmatpush1.msra.mxu0 0.0
      %958 = vmatprep.subr.mxu0 0.0
      %959 = vmatpush1.msra.mxu0 0.0
      %960 = vmatprep.subr.mxu0 0.0
      %961 = vmatpush1.msra.mxu0 0.0
      %962 = vmatprep.subr.mxu0 0.0
      %963 = vmatpush1.msra.mxu0 0.0
      %964 = vmatprep.mubr.f32.mxu0 0.0
      %965 = vmatmul.mubr.f32.gmra.mrb[0].mxu0 %v883
      %v966 = vpop.f32.mrb[0].mxu0
      %v967 = vadd.f32 0.0, %v966
      %v968 = vpop.f32.mrb[0].mxu0
      %v969 = vadd.f32 0.0, %v968
      %970 = vmatprep.mubr.f32.mxu0 0.0
      %971 = vmatmul.mubr.f32.gmra.mrb[0].mxu0 %v886
      %v972 = vpop.f32.mrb[0].mxu0
      %v973 = vadd.f32 0.0, %v972
      %v974 = vpop.f32.mrb[0].mxu0
      %v975 = vadd.f32 0.0, %v974
      %976 = vmatprep.mubr.f32.mxu0 0.0
      %977 = vmatmul.mubr.f32.gmra.mrb[0].mxu0 %v889
      %v978 = vpop.f32.mrb[0].mxu0
      %v979 = vadd.f32 0.0, %v978
      %v980 = vpop.f32.mrb[0].mxu0
      %v981 = vadd.f32 0.0, %v980
      %982 = vmatprep.mubr.f32.mxu0 0.0
      %983 = vmatmul.mubr.f32.gmra.mrb[0].mxu0 %v892
      %v984 = vpop.f32.mrb[0].mxu0
      %v985 = vadd.f32 0.0, %v984
      %v986 = vpop.f32.mrb[0].mxu0
      %v987 = vadd.f32 0.0, %v986
      %988 = vdwg.mxu0
      %v989 = vadd.f32 %v789, %v967
      %v990 = vadd.f32 %v791, %v969
      %v991 = vadd.f32 %v795, %v973
      %v992 = vadd.f32 %v797, %v975
      %v993 = vadd.f32 %v801, %v979
      %v994 = vadd.f32 %v803, %v981
      %v995 = vadd.f32 %v807, %v985
      %v996 = vadd.f32 %v809, %v987
      %998 = vset.pattern.permute.xlu0 0
      %999 = vperm.xlu0 %998, %v443
      %v1000 = vpop.permute.xlu0 %999
      %1003 = vset.pattern.permute.xlu0 0
      %1004 = vperm.xlu0 %1003, %v444
      %v1005 = vpop.permute.xlu0 %1004
      %1008 = vset.pattern.permute.xlu0 0
      %1009 = vperm.xlu0 %1008, %v445
      %v1010 = vpop.permute.xlu0 %1009
      %1013 = vset.pattern.permute.xlu0 0
      %1014 = vperm.xlu0 %1013, %v446
      %v1015 = vpop.permute.xlu0 %1014
      %v1017 = vadd.f32 %v989, %v1000
      %v1018 = vadd.f32 %v990, %v1000
      %v1019 = vadd.f32 %v991, %v1005
      %v1020 = vadd.f32 %v992, %v1005
      %v1021 = vadd.f32 %v993, %v1010
      %v1022 = vadd.f32 %v994, %v1010
      %v1023 = vadd.f32 %v995, %v1015
      %v1024 = vadd.f32 %v996, %v1015
      %1025 = vst [vmem:[%s266] sm:$0xff] %v1017
      %1026 = vst.msk [vmem:[%s266 + $0x8] sm:$0xff] %vm450, %v1018
      %1027 = vst [vmem:[%s266 + $0x10] sm:$0xff] %v1019
      %1028 = vst.msk [vmem:[%s266 + $0x18] sm:$0xff] %vm450, %v1020
      %1029 = vst [vmem:[%s266 + $0x20] sm:$0xff] %v1021
      %1030 = vst.msk [vmem:[%s266 + $0x28] sm:$0xff] %vm450, %v1022
      %1031 = vst [vmem:[%s266 + $0x30] sm:$0xff] %v1023
      %1032 = vst.msk [vmem:[%s266 + $0x38] sm:$0xff] %vm450, %v1024
      %v1033 = vsel %vm450, %v1018, 0.0
      %v1034 = vadd.f32 %v1017, %v1033
      %1035 = vadd.xlane.f32.xlu0 %v1034
      %v1036 = vpop.xlane.xlu0 %1035
      %v1037 = vsel %vm450, %v1020, 0.0
      %v1038 = vadd.f32 %v1019, %v1037
      %1039 = vadd.xlane.f32.xlu0 %v1038
      %v1040 = vpop.xlane.xlu0 %1039
      %v1041 = vsel %vm450, %v1022, 0.0
      %v1042 = vadd.f32 %v1021, %v1041
      %1043 = vadd.xlane.f32.xlu0 %v1042
      %v1044 = vpop.xlane.xlu0 %1043
      %v1045 = vsel %vm450, %v1024, 0.0
      %v1046 = vadd.f32 %v1023, %v1045
      %1047 = vadd.xlane.f32.xlu0 %v1046
      %v1048 = vpop.xlane.xlu0 %1047
      %v1049 = vadd.f32 %v1036, 0.0
      %v1050 = vadd.f32 %v1040, 0.0
      %v1051 = vadd.f32 %v1044, 0.0
      %v1052 = vadd.f32 %v1048, 0.0
      %v1053 = vmul.f32 %v1017, %v1017
      %v1054 = vmul.f32 %v1018, %v1018
      %v1055 = vmul.f32 %v1019, %v1019
      %v1056 = vmul.f32 %v1020, %v1020
      %v1057 = vmul.f32 %v1021, %v1021
      %v1058 = vmul.f32 %v1022, %v1022
      %v1059 = vmul.f32 %v1023, %v1023
      %v1060 = vmul.f32 %v1024, %v1024
      %v1061 = vsel %vm450, %v1054, 0.0
      %v1062 = vadd.f32 %v1053, %v1061
      %1063 = vadd.xlane.f32.xlu0 %v1062
      %v1064 = vpop.xlane.xlu0 %1063
      %v1065 = vsel %vm450, %v1056, 0.0
      %v1066 = vadd.f32 %v1055, %v1065
      %1067 = vadd.xlane.f32.xlu0 %v1066
      %v1068 = vpop.xlane.xlu0 %1067
      %v1069 = vsel %vm450, %v1058, 0.0
      %v1070 = vadd.f32 %v1057, %v1069
      %1071 = vadd.xlane.f32.xlu0 %v1070
      %v1072 = vpop.xlane.xlu0 %1071
      %v1073 = vsel %vm450, %v1060, 0.0
      %v1074 = vadd.f32 %v1059, %v1073
      %1075 = vadd.xlane.f32.xlu0 %v1074
      %v1076 = vpop.xlane.xlu0 %1075
      %v1077 = vadd.f32 %v1064, 0.0
      %v1078 = vadd.f32 %v1068, 0.0
      %v1079 = vadd.f32 %v1072, 0.0
      %v1080 = vadd.f32 %v1076, 0.0
      %vm1081 = vcmask 7168
      %1082 = vst.msk [vmem:[%s271] sm:$0xff] %vm1081, %v1049
      %1083 = vst.msk [vmem:[%s271 + $0x8] sm:$0xff] %vm1081, %v1050
      %1084 = vst.msk [vmem:[%s271 + $0x10] sm:$0xff] %vm1081, %v1051
      %1085 = vst.msk [vmem:[%s271 + $0x18] sm:$0xff] %vm1081, %v1052
      %1086 = vst.msk [vmem:[%s276] sm:$0xff] %vm1081, %v1077
      %1087 = vst.msk [vmem:[%s276 + $0x8] sm:$0xff] %vm1081, %v1078
      %1088 = vst.msk [vmem:[%s276 + $0x10] sm:$0xff] %vm1081, %v1079
      %1089 = vst.msk [vmem:[%s276 + $0x18] sm:$0xff] %vm1081, %v1080
      %p1090 = scmp.lt.s32.totalorder %s18, 1
      %s1091 = scalar_select %p1090, %s18, 1
      %s1092 = smul.addr %s1091, 8
      %s1093 = smul.addr %s1092, 8
      %s1094 = scalar_lea.vmem %s4, %s1093
      %p1095 = scmp.lt.s32.totalorder %s18, 1
      %s1096 = scalar_select %p1095, %s18, 1
      %s1097 = smul.addr %s1096, 4
      %s1098 = smul.addr %s1097, 8
      %s1099 = scalar_lea.vmem %s5, %s1098
      %p1100 = scmp.lt.s32.totalorder %s18, 1
      %s1101 = scalar_select %p1100, %s18, 1
      %s1102 = smul.addr %s1101, 4
      %s1103 = smul.addr %s1102, 8
      %s1104 = scalar_lea.vmem %s6, %s1103
      // Predicated region
      $region37: #{_lambda_.2} parent=35 // pred_check
        %p1105 = pneg %p125
      $region38: #{_lambda_.2} parent=35 // pred_check_branch
        %1107 = sbr.rel (%p1105) target = $region40
      $region39: #{_lambda_.2} parent=35 // pred_region
        _
      $region40: #{_lambda_.2} parent=35 // pred_fallthru
        _
      // Predicated region
      $region41: #{_lambda_.2} parent=35 // pred_check
        %p1108 = pneg %p151
      $region42: #{_lambda_.2} parent=35 // pred_check_branch
        %1110 = sbr.rel (%p1108) target = $region44
      $region43: #{_lambda_.2} parent=35 // pred_region
        _
      $region44: #{_lambda_.2} parent=35 // pred_fallthru
        _
      // Predicated region
      $region45: #{_lambda_.2} parent=35 // pred_check
        %p1111 = pneg %p177
      $region46: #{_lambda_.2} parent=35 // pred_check_branch
        %1113 = sbr.rel (%p1111) target = $region48
      $region47: #{_lambda_.2} parent=35 // pred_region
        _
      $region48: #{_lambda_.2} parent=35 // pred_fallthru
        _
    $region36: #{_lambda_.2} parent=5 // pred_fallthru
      _
    %p1114 = scmp.le.s32.totalorder 2, %s13
    // Predicated region
    $region49: #{_lambda_.2} parent=5 // pred_check
      %p1115 = pneg %p1114
    $region50: #{_lambda_.2} parent=5 // pred_check_branch
      %1117 = sbr.rel (%p1115) target = $region52
    $region51: #{_lambda_.2} parent=5 // pred_region
      %s1118 = ssub.s32 %s13, 2
      // Predicated region
      $region53: #{_lambda_.2} parent=51 // pred_check
        %p1119 = pneg %p131
      $region54: #{_lambda_.2} parent=51 // pred_check_branch
        %1121 = sbr.rel (%p1119) target = $region56
      $region55: #{_lambda_.2} parent=51 // pred_region
        %p1122 = scmp.lt.s32.totalorder %s19, 1
        %s1123 = scalar_select %p1122, %s19, 1
        %s1124 = smul.addr %s1123, 8
        %s1125 = smul.addr %s1124, 8
        %s1126 = scalar_lea.vmem %s4, %s1125
      $region56: #{_lambda_.2} parent=51 // pred_fallthru
        _
      // Predicated region
      $region57: #{_lambda_.2} parent=51 // pred_check
        %p1127 = pneg %p157
      $region58: #{_lambda_.2} parent=51 // pred_check_branch
        %1129 = sbr.rel (%p1127) target = $region60
      $region59: #{_lambda_.2} parent=51 // pred_region
        %p1130 = scmp.lt.s32.totalorder %s19, 1
        %s1131 = scalar_select %p1130, %s19, 1
        %s1132 = smul.addr %s1131, 4
        %s1133 = smul.addr %s1132, 8
        %s1134 = scalar_lea.vmem %s5, %s1133
      $region60: #{_lambda_.2} parent=51 // pred_fallthru
        _
      // Predicated region
      $region61: #{_lambda_.2} parent=51 // pred_check
        %p1135 = pneg %p183
      $region62: #{_lambda_.2} parent=51 // pred_check_branch
        %1137 = sbr.rel (%p1135) target = $region64
      $region63: #{_lambda_.2} parent=51 // pred_region
        %p1138 = scmp.lt.s32.totalorder %s19, 1
        %s1139 = scalar_select %p1138, %s19, 1
        %s1140 = smul.addr %s1139, 4
        %s1141 = smul.addr %s1140, 8
        %s1142 = scalar_lea.vmem %s6, %s1141
      $region64: #{_lambda_.2} parent=51 // pred_fallthru
        _
    $region52: #{_lambda_.2} parent=5 // pred_fallthru
      _
  $region6: #{_lambda_.2} parent=0 // loop_footer
    %s17 = sadd.s32 1, %s13
  $region7: #{_lambda_.2} parent=0 // loop_footer_branch
    %12 = sbr.rel target = $region3
  $region8: #{_lambda_.2} parent=0 // loop_exit
    _

</llo_original>
